<compile_context>
chip_gen: v5e
topology: v5e:2x2
jax: 0.10.0
libtpu: 0.0.40
codegen_flags: <defaults>
</compile_context>

<pallas_src>
import math
import functools

import jax
import jax.numpy as jnp
from jax.experimental import pallas as pl
from jax.experimental.pallas import tpu as pltpu


# ----------------------------- helpers --------------------------------------


def _layer_norm(x, g, b, eps=1e-5):
    # PyTorch LayerNorm: biased variance, eps inside rsqrt, affine gamma/beta.
    m = jnp.mean(x, axis=-1, keepdims=True)
    var = jnp.mean((x - m) ** 2, axis=-1, keepdims=True)
    return (x - m) * jax.lax.rsqrt(var + eps) * g + b


def _gelu_exact(x):
    # nn.GELU default (erf form).
    return 0.5 * x * (1.0 + jax.lax.erf(x * (1.0 / math.sqrt(2.0))))


# ----------------------------- kernel ----------------------------------------


def encoder_stack_kernel(x_ref,
                         ln1g_ref, ln1b_ref,
                         wqkv_ref, wo_ref,
                         ln2g_ref, ln2b_ref,
                         w1_ref, b1_ref, w2_ref, b2_ref,
                         lnpg_ref, lnpb_ref,
                         o_ref, *, n_head):
    """All encoder layers for one batch row; grid = (batch, layer).

    The output block (1, S, D) is revisited across the layer axis and acts as
    the VMEM-resident activation carry.  ln_post runs on the last layer.
    """
    layer = pl.program_id(1)
    n_layer = pl.num_programs(1)

    # Initialize the resident activation from the embedded input.
    @pl.when(layer == 0)
    def _():
        o_ref[0] = x_ref[0]

    x = o_ref[0]                                   # (S, D) float32
    S, D = x.shape
    d_k = D // n_head
    scale = 1.0 / math.sqrt(d_k)                   # == net scale of (q*dk^-.25)@(k*dk^-.25)^T

    # ---- self-attention sub-block: x = x + Wo(attn(LN(x))) (non-causal) ----
    xn = _layer_norm(x, ln1g_ref[0], ln1b_ref[0])
    # Fused, head-batched QKV projection: (3H, S, D) @ (3H, D, d_k) -> (3H, S, d_k)
    xb = jnp.broadcast_to(xn, (3 * n_head, S, D))
    qkv = jax.lax.dot_general(
        xb, wqkv_ref[0], (((2,), (1,)), ((0,), (0,))),
        preferred_element_type=jnp.float32)
    q = qkv[:n_head]                               # (H, S, d_k)
    k = qkv[n_head:2 * n_head]
    v = qkv[2 * n_head:]

    # scores: (H, S, S), batched over heads
    s = jax.lax.dot_general(
        q, k, (((2,), (2,)), ((0,), (0,))),
        preferred_element_type=jnp.float32) * scale
    s = s - jnp.max(s, axis=-1, keepdims=True)
    e = jnp.exp(s)
    w = e * pl.reciprocal(jnp.sum(e, axis=-1, keepdims=True), approx=True)

    # context: (H, S, d_k)
    ctx = jax.lax.dot_general(
        w, v, (((2,), (1,)), ((0,), (0,))),
        preferred_element_type=jnp.float32)

    # output projection folded per head: (H, S, d_k) @ (H, d_k, D) -> (H, S, D)
    out_h = jax.lax.dot_general(
        ctx, wo_ref[0], (((2,), (1,)), ((0,), (0,))),
        preferred_element_type=jnp.float32)
    attn = out_h[0]
    for h in range(1, n_head):                     # static unrolled lane-dense adds
        attn = attn + out_h[h]
    x = x + attn

    # ---- MLP sub-block: x = x + W2(GELU(W1(LN(x)) + b1)) + b2 ----
    xn2 = _layer_norm(x, ln2g_ref[0], ln2b_ref[0])
    h1 = jnp.dot(xn2, w1_ref[0], preferred_element_type=jnp.float32) + b1_ref[0]
    h1 = _gelu_exact(h1)
    x = x + jnp.dot(h1, w2_ref[0], preferred_element_type=jnp.float32) + b2_ref[0]

    # ---- write back; fold ln_post into the last layer ----
    @pl.when(layer < n_layer - 1)
    def _():
        o_ref[0] = x

    @pl.when(layer == n_layer - 1)
    def _():
        o_ref[0] = _layer_norm(x, lnpg_ref[...], lnpb_ref[...])


# ----------------------------- wrapper ----------------------------------------


def run_encoder_stack(x, p, n_head):
    """x: (B, S, D) float32 embedded + positional input."""
    B, S, D = x.shape
    L = p["wqkv_h"].shape[0]
    d_ff = p["w1"].shape[-1]

    def layer_spec(arr):
        nd = arr.ndim
        return pl.BlockSpec((1,) + arr.shape[1:],
                            lambda b, l, nd=nd: (l,) + (0,) * (nd - 1))

    in_specs = [
        pl.BlockSpec((1, S, D), lambda b, l: (b, 0, 0)),          # x
        layer_spec(p["ln1_g"]), layer_spec(p["ln1_b"]),
        layer_spec(p["wqkv_h"]), layer_spec(p["wo_h"]),
        layer_spec(p["ln2_g"]), layer_spec(p["ln2_b"]),
        layer_spec(p["w1"]), layer_spec(p["b1"]),
        layer_spec(p["w2"]), layer_spec(p["b2"]),
        pl.BlockSpec((1, D), lambda b, l: (0, 0)),                # ln_post gamma
        pl.BlockSpec((1, D), lambda b, l: (0, 0)),                # ln_post beta
    ]

    # Advisory cost estimate so XLA schedules around the custom call sensibly.
    flops = int(B * L * (2 * S * D * (4 * D + 2 * d_ff) + 4 * S * S * D))
    transcendentals = int(B * L * (n_head * S * S + S * d_ff))
    bytes_accessed = int(4 * (2 * B * S * D
                              + L * (4 * D * D + 2 * D * d_ff + 2 * d_ff + 6 * D)
                              + 2 * D))

    return pl.pallas_call(
        functools.partial(encoder_stack_kernel, n_head=n_head),
        out_shape=jax.ShapeDtypeStruct((B, S, D), jnp.float32),
        grid_spec=pltpu.PrefetchScalarGridSpec(
            num_scalar_prefetch=0,
            grid=(B, L),
            in_specs=in_specs,
            out_specs=pl.BlockSpec((1, S, D), lambda b, l: (b, 0, 0)),
        ),
        compiler_params=pltpu.CompilerParams(
            dimension_semantics=("parallel", "arbitrary"),
            vmem_limit_bytes=48 * 1024 * 1024,
        ),
        cost_estimate=pl.CostEstimate(flops=flops,
                                      transcendentals=transcendentals,
                                      bytes_accessed=bytes_accessed),
    )(x, p["ln1_g"], p["ln1_b"], p["wqkv_h"], p["wo_h"],
      p["ln2_g"], p["ln2_b"], p["w1"], p["b1"], p["w2"], p["b2"],
      p["lnp_g"], p["lnp_b"])


def positional_encoding(seq_len, d_model):
    pos = jnp.arange(seq_len, dtype=jnp.float32)[:, None]
    div = jnp.exp(jnp.arange(0, d_model, 2, dtype=jnp.float32)
                  * (-math.log(10000.0) / d_model))
    pe = jnp.zeros((seq_len, d_model), jnp.float32)
    pe = pe.at[:, 0::2].set(jnp.sin(pos * div))
    pe = pe.at[:, 1::2].set(jnp.cos(pos * div)[:, : d_model // 2])
    return pe


def encoder_forward(tokens, params, n_head):
    # Glue (plain JAX): embedding gather + sqrt(d_model) scale + positional add.
    d_model = params["emb"].shape[1]
    S = tokens.shape[1]
    x = params["emb"][tokens] * math.sqrt(d_model)          # (B, S, D)
    x = x + params["pe"][:S][None, :, :]
    return run_encoder_stack(x, params, n_head)


# ----------------------------- param init ------------------------------------


def init_params(key, vocab_size, seq_len, d_model, n_head, n_layer):
    d_ff = 4 * d_model
    d_k = d_model // n_head
    keys = jax.random.split(key, 1 + 8 * n_layer)
    ki = iter(range(len(keys)))

    def nrm(k, shape, scale=0.05):
        return scale * jax.random.normal(k, shape, jnp.float32)

    def to_heads(w_t):                 # (D_in, D_out) -> (H, D_in, d_k)
        return w_t.reshape(d_model, n_head, d_k).transpose(1, 0, 2)

    emb = jax.random.normal(keys[next(ki)], (vocab_size, d_model), jnp.float32)

    ln1_g, ln1_b, ln2_g, ln2_b = [], [], [], []
    wqkv_h, wo_h, w1, b1, w2, b2 = [], [], [], [], [], []
    for _ in range(n_layer):
        # PyTorch Linear stores W as (out, in); pre-transpose to (in, out) for x @ W^T.
        wq_t = nrm(keys[next(ki)], (d_model, d_model)).T
        wk_t = nrm(keys[next(ki)], (d_model, d_model)).T
        wv_t = nrm(keys[next(ki)], (d_model, d_model)).T
        wo_t = nrm(keys[next(ki)], (d_model, d_model)).T
        w1_t = nrm(keys[next(ki)], (d_ff, d_model)).T       # (D, d_ff)
        w2_t = nrm(keys[next(ki)], (d_model, d_ff)).T       # (d_ff, D)
        b1_l = nrm(keys[next(ki)], (1, d_ff), scale=0.01)
        b2_l = nrm(keys[next(ki)], (1, d_model), scale=0.01)

        ln1_g.append(jnp.ones((1, d_model), jnp.float32))
        ln1_b.append(jnp.zeros((1, d_model), jnp.float32))
        ln2_g.append(jnp.ones((1, d_model), jnp.float32))
        ln2_b.append(jnp.zeros((1, d_model), jnp.float32))
        wqkv_h.append(jnp.concatenate(
            [to_heads(wq_t), to_heads(wk_t), to_heads(wv_t)], axis=0))   # (3H, D, d_k)
        wo_h.append(wo_t.reshape(n_head, d_k, d_model))                  # (H, d_k, D)
        w1.append(w1_t)
        b1.append(b1_l)
        w2.append(w2_t)
        b2.append(b2_l)

    return {
        "emb": emb,
        "pe": positional_encoding(seq_len, d_model),
        "ln1_g": jnp.stack(ln1_g), "ln1_b": jnp.stack(ln1_b),     # (L, 1, D)
        "wqkv_h": jnp.stack(wqkv_h),                              # (L, 3H, D, d_k)
        "wo_h": jnp.stack(wo_h),                                  # (L, H, d_k, D)
        "ln2_g": jnp.stack(ln2_g), "ln2_b": jnp.stack(ln2_b),     # (L, 1, D)
        "w1": jnp.stack(w1), "b1": jnp.stack(b1),                 # (L, D, d_ff), (L, 1, d_ff)
        "w2": jnp.stack(w2), "b2": jnp.stack(b2),                 # (L, d_ff, D), (L, 1, D)
        "lnp_g": jnp.ones((1, d_model), jnp.float32),
        "lnp_b": jnp.zeros((1, d_model), jnp.float32),
    }


# ----------------------------- pure-JAX reference -----------------------------


def encoder_reference(tokens, p, n_head):
    D = p["emb"].shape[1]
    H = n_head
    d_k = D // H
    S = tokens.shape[1]
    x = p["emb"][tokens] * math.sqrt(D)
    x = x + p["pe"][:S][None, :, :]
    for li in range(p["wqkv_h"].shape[0]):
        xn = _layer_norm(x, p["ln1_g"][li], p["ln1_b"][li])
        qkv = jnp.einsum("bsd,gdk->gbsk", xn, p["wqkv_h"][li])
        q, k, v = qkv[:H], qkv[H:2 * H], qkv[2 * H:]
        s = jnp.einsum("hbsk,hbtk->hbst", q, k) / math.sqrt(d_k)
        w = jax.nn.softmax(s, axis=-1)
        ctx = jnp.einsum("hbst,hbtk->hbsk", w, v)
        x = x + jnp.einsum("hbsk,hkd->bsd", ctx, p["wo_h"][li])
        xn2 = _layer_norm(x, p["ln2_g"][li], p["ln2_b"][li])
        h1 = _gelu_exact(xn2 @ p["w1"][li] + p["b1"][li])
        x = x + h1 @ p["w2"][li] + p["b2"][li]
    return _layer_norm(x, p["lnp_g"], p["lnp_b"])


# ----------------------------- main -------------------------------------------


if __name__ == "__main__":
    vocab_size, seq_len, d_model, n_head, n_layer = 50, 8, 32, 4, 2
    batch = 2

    key = jax.random.PRNGKey(0)
    k_params, k_tok = jax.random.split(key)
    params = init_params(k_params, vocab_size, seq_len, d_model, n_head, n_layer)
    tokens = jax.random.randint(k_tok, (batch, seq_len), 0, vocab_size, dtype=jnp.int32)

    out = encoder_forward(tokens, params, n_head)
    out = jax.block_until_ready(out)
    assert out.shape == (batch, seq_len, d_model) and out.dtype == jnp.float32

    # Correctness check against a pure-JAX reference of the same forward pass.
    ref = jax.block_until_ready(encoder_reference(tokens, params, n_head))
    assert jnp.allclose(out, ref, atol=2e-2, rtol=2e-2), \
        float(jnp.max(jnp.abs(out - ref)))

    print("KERNEL_OK")
</pallas_src>

<mosaic_0001>
module attributes {stable_mosaic.version = 11 : i64} {
  func.func @encoder_stack_kernel(%arg0: i32, %arg1: i32, %arg2: memref<1x8x32xf32, #tpu.memory_space<vmem>>, %arg3: memref<1x1x32xf32, #tpu.memory_space<vmem>>, %arg4: memref<1x1x32xf32, #tpu.memory_space<vmem>>, %arg5: memref<1x12x32x8xf32, #tpu.memory_space<vmem>>, %arg6: memref<1x4x8x32xf32, #tpu.memory_space<vmem>>, %arg7: memref<1x1x32xf32, #tpu.memory_space<vmem>>, %arg8: memref<1x1x32xf32, #tpu.memory_space<vmem>>, %arg9: memref<1x32x128xf32, #tpu.memory_space<vmem>>, %arg10: memref<1x1x128xf32, #tpu.memory_space<vmem>>, %arg11: memref<1x128x32xf32, #tpu.memory_space<vmem>>, %arg12: memref<1x1x32xf32, #tpu.memory_space<vmem>>, %arg13: memref<1x32xf32, #tpu.memory_space<vmem>>, %arg14: memref<1x32xf32, #tpu.memory_space<vmem>>, %arg15: memref<1x8x32xf32, #tpu.memory_space<vmem>>) attributes {dimension_semantics = [#tpu.dimension_semantics<parallel>, #tpu.dimension_semantics<arbitrary>], iteration_bounds = array<i64: 2, 2>, scalar_prefetch = 0 : i64, scratch_operands = 0 : i64, tpu.core_type = #tpu.core_type<tc>, window_params = [{transform_indices = @transform_0, window_bounds = array<i64: 1, 8, 32>}, {transform_indices = @transform_1, window_bounds = array<i64: 1, 1, 32>}, {transform_indices = @transform_2, window_bounds = array<i64: 1, 1, 32>}, {transform_indices = @transform_3, window_bounds = array<i64: 1, 12, 32, 8>}, {transform_indices = @transform_4, window_bounds = array<i64: 1, 4, 8, 32>}, {transform_indices = @transform_5, window_bounds = array<i64: 1, 1, 32>}, {transform_indices = @transform_6, window_bounds = array<i64: 1, 1, 32>}, {transform_indices = @transform_7, window_bounds = array<i64: 1, 32, 128>}, {transform_indices = @transform_8, window_bounds = array<i64: 1, 1, 128>}, {transform_indices = @transform_9, window_bounds = array<i64: 1, 128, 32>}, {transform_indices = @transform_10, window_bounds = array<i64: 1, 1, 32>}, {pipeline_mode = #tpu.pipeline_mode<synchronous>, transform_indices = @transform_11, window_bounds = array<i64: 1, 32>}, {pipeline_mode = #tpu.pipeline_mode<synchronous>, transform_indices = @transform_12, window_bounds = array<i64: 1, 32>}, {transform_indices = @transform_13, window_bounds = array<i64: 1, 8, 32>}]} {
    %c0_i32 = arith.constant 0 : i32
    %0 = arith.cmpi eq, %arg1, %c0_i32 : i32
    %1 = arith.extui %0 : i1 to i32
    %c0_i32_0 = arith.constant 0 : i32
    %2 = arith.cmpi ne, %1, %c0_i32_0 : i32
    scf.if %2 {
      %c0_59 = arith.constant 0 : index
      %c0_60 = arith.constant 0 : index
      %c0_61 = arith.constant 0 : index
      %123 = vector.load %arg2[%c0_59, %c0_60, %c0_61] : memref<1x8x32xf32, #tpu.memory_space<vmem>>, vector<1x8x32xf32>
      %124 = vector.shape_cast %123 : vector<1x8x32xf32> to vector<8x32xf32>
      %c0_62 = arith.constant 0 : index
      %c0_63 = arith.constant 0 : index
      %c0_64 = arith.constant 0 : index
      %125 = vector.load %arg15[%c0_62, %c0_63, %c0_64] : memref<1x8x32xf32, #tpu.memory_space<vmem>>, vector<1x8x32xf32>
      %126 = vector.shape_cast %125 : vector<1x8x32xf32> to vector<8x32xf32>
      %127 = vector.shape_cast %124 : vector<8x32xf32> to vector<1x8x32xf32>
      tpu.vector_store %arg15[%c0_62, %c0_63, %c0_64], %127 {strides = array<i32>} : memref<1x8x32xf32, #tpu.memory_space<vmem>>, vector<1x8x32xf32>,
    } else {
    }
    %c0 = arith.constant 0 : index
    %c0_1 = arith.constant 0 : index
    %c0_2 = arith.constant 0 : index
    %3 = vector.load %arg15[%c0, %c0_1, %c0_2] : memref<1x8x32xf32, #tpu.memory_space<vmem>>, vector<1x8x32xf32>
    %4 = vector.shape_cast %3 : vector<1x8x32xf32> to vector<8x32xf32>
    %c0_3 = arith.constant 0 : index
    %c0_4 = arith.constant 0 : index
    %c0_5 = arith.constant 0 : index
    %5 = vector.load %arg3[%c0_3, %c0_4, %c0_5] : memref<1x1x32xf32, #tpu.memory_space<vmem>>, vector<1x1x32xf32>
    %6 = vector.shape_cast %5 : vector<1x1x32xf32> to vector<1x32xf32>
    %c0_6 = arith.constant 0 : index
    %c0_7 = arith.constant 0 : index
    %c0_8 = arith.constant 0 : index
    %7 = vector.load %arg4[%c0_6, %c0_7, %c0_8] : memref<1x1x32xf32, #tpu.memory_space<vmem>>, vector<1x1x32xf32>
    %8 = vector.shape_cast %7 : vector<1x1x32xf32> to vector<1x32xf32>
    %cst = arith.constant dense<0.000000e+00> : vector<8xf32>
    %9 = vector.multi_reduction <add>, %4, %cst [1] : vector<8x32xf32> to vector<8xf32>
    %10 = vector.shape_cast %9 : vector<8xf32> to vector<8x1xf32>
    %cst_9 = arith.constant 3.200000e+01 : f32
    %11 = vector.broadcast %cst_9 : f32 to vector<8x1xf32>
    %12 = arith.divf %10, %11 : vector<8x1xf32>
    %13 = vector.broadcast %12 : vector<8x1xf32> to vector<8x32xf32>
    %14 = arith.subf %4, %13 : vector<8x32xf32>
    %15 = arith.mulf %14, %14 : vector<8x32xf32>
    %cst_10 = arith.constant dense<0.000000e+00> : vector<8xf32>
    %16 = vector.multi_reduction <add>, %15, %cst_10 [1] : vector<8x32xf32> to vector<8xf32>
    %17 = vector.shape_cast %16 : vector<8xf32> to vector<8x1xf32>
    %cst_11 = arith.constant 3.200000e+01 : f32
    %18 = vector.broadcast %cst_11 : f32 to vector<8x1xf32>
    %19 = arith.divf %17, %18 : vector<8x1xf32>
    %20 = vector.broadcast %12 : vector<8x1xf32> to vector<8x32xf32>
    %21 = arith.subf %4, %20 : vector<8x32xf32>
    %cst_12 = arith.constant 9.99999974E-6 : f32
    %22 = vector.broadcast %cst_12 : f32 to vector<8x1xf32>
    %23 = arith.addf %19, %22 : vector<8x1xf32>
    %24 = math.rsqrt %23 : vector<8x1xf32>
    %25 = vector.broadcast %24 : vector<8x1xf32> to vector<8x32xf32>
    %26 = arith.mulf %21, %25 : vector<8x32xf32>
    %27 = vector.broadcast %6 : vector<1x32xf32> to vector<8x32xf32>
    %28 = arith.mulf %26, %27 : vector<8x32xf32>
    %29 = vector.broadcast %8 : vector<1x32xf32> to vector<8x32xf32>
    %30 = arith.addf %28, %29 : vector<8x32xf32>
    %31 = vector.shape_cast %30 : vector<8x32xf32> to vector<1x8x32xf32>
    %32 = vector.broadcast %31 : vector<1x8x32xf32> to vector<12x8x32xf32>
    %c0_13 = arith.constant 0 : index
    %c0_14 = arith.constant 0 : index
    %c0_15 = arith.constant 0 : index
    %c0_16 = arith.constant 0 : index
    %33 = vector.load %arg5[%c0_13, %c0_14, %c0_15, %c0_16] : memref<1x12x32x8xf32, #tpu.memory_space<vmem>>, vector<1x12x32x8xf32>
    %34 = vector.shape_cast %33 : vector<1x12x32x8xf32> to vector<12x32x8xf32>
    %cst_17 = arith.constant dense<0.000000e+00> : vector<12x8x8xf32>
    %35 = tpu.matmul %32, %34, %cst_17 {dimension_numbers = #tpu.dot_dimension_numbers<[2], [1], [1], [2], [0, 0, 0, 1, 1, 2], [0], [0]>} : vector<12x8x32xf32>, vector<12x32x8xf32>, vector<12x8x8xf32> -> vector<12x8x8xf32>
    %36 = vector.extract_strided_slice %35 {offsets = [0, 0, 0], sizes = [4, 8, 8], strides = [1, 1, 1]} : vector<12x8x8xf32> to vector<4x8x8xf32>
    %37 = vector.extract_strided_slice %35 {offsets = [4, 0, 0], sizes = [4, 8, 8], strides = [1, 1, 1]} : vector<12x8x8xf32> to vector<4x8x8xf32>
    %38 = vector.extract_strided_slice %35 {offsets = [8, 0, 0], sizes = [4, 8, 8], strides = [1, 1, 1]} : vector<12x8x8xf32> to vector<4x8x8xf32>
    %cst_18 = arith.constant dense<0.000000e+00> : vector<4x8x8xf32>
    %39 = tpu.matmul %36, %37, %cst_18 {dimension_numbers = #tpu.dot_dimension_numbers<[2], [2], [1], [1], [0, 0, 0, 1, 1, 1], [0], [0]>} : vector<4x8x8xf32>, vector<4x8x8xf32>, vector<4x8x8xf32> -> vector<4x8x8xf32>
    %cst_19 = arith.constant 0.353553385 : f32
    %40 = vector.broadcast %cst_19 : f32 to vector<4x8x8xf32>
    %41 = arith.mulf %39, %40 : vector<4x8x8xf32>
    %cst_20 = arith.constant dense<0xFF800000> : vector<4x8xf32>
    %42 = vector.multi_reduction <maximumf>, %41, %cst_20 [2] : vector<4x8x8xf32> to vector<4x8xf32>
    %43 = vector.shape_cast %42 : vector<4x8xf32> to vector<4x8x1xf32>
    %44 = vector.broadcast %43 : vector<4x8x1xf32> to vector<4x8x8xf32>
    %45 = arith.subf %41, %44 : vector<4x8x8xf32>
    %46 = math.exp %45 : vector<4x8x8xf32>
    %cst_21 = arith.constant dense<0.000000e+00> : vector<4x8xf32>
    %47 = vector.multi_reduction <add>, %46, %cst_21 [2] : vector<4x8x8xf32> to vector<4x8xf32>
    %48 = vector.shape_cast %47 : vector<4x8xf32> to vector<4x8x1xf32>
    %49 = tpu.reciprocal %48 {approx = true} : vector<4x8x1xf32> -> vector<4x8x1xf32>
    %50 = vector.broadcast %49 : vector<4x8x1xf32> to vector<4x8x8xf32>
    %51 = arith.mulf %46, %50 : vector<4x8x8xf32>
    %cst_22 = arith.constant dense<0.000000e+00> : vector<4x8x8xf32>
    %52 = tpu.matmul %51, %38, %cst_22 {dimension_numbers = #tpu.dot_dimension_numbers<[2], [1], [1], [2], [0, 0, 0, 1, 1, 2], [0], [0]>} : vector<4x8x8xf32>, vector<4x8x8xf32>, vector<4x8x8xf32> -> vector<4x8x8xf32>
    %c0_23 = arith.constant 0 : index
    %c0_24 = arith.constant 0 : index
    %c0_25 = arith.constant 0 : index
    %c0_26 = arith.constant 0 : index
    %53 = vector.load %arg6[%c0_23, %c0_24, %c0_25, %c0_26] : memref<1x4x8x32xf32, #tpu.memory_space<vmem>>, vector<1x4x8x32xf32>
    %54 = vector.shape_cast %53 : vector<1x4x8x32xf32> to vector<4x8x32xf32>
    %cst_27 = arith.constant dense<0.000000e+00> : vector<4x8x32xf32>
    %55 = tpu.matmul %52, %54, %cst_27 {dimension_numbers = #tpu.dot_dimension_numbers<[2], [1], [1], [2], [0, 0, 0, 1, 1, 2], [0], [0]>} : vector<4x8x8xf32>, vector<4x8x32xf32>, vector<4x8x32xf32> -> vector<4x8x32xf32>
    %56 = vector.extract_strided_slice %55 {offsets = [0, 0, 0], sizes = [1, 8, 32], strides = [1, 1, 1]} : vector<4x8x32xf32> to vector<1x8x32xf32>
    %57 = vector.shape_cast %56 : vector<1x8x32xf32> to vector<8x32xf32>
    %58 = vector.extract_strided_slice %55 {offsets = [1, 0, 0], sizes = [1, 8, 32], strides = [1, 1, 1]} : vector<4x8x32xf32> to vector<1x8x32xf32>
    %59 = vector.shape_cast %58 : vector<1x8x32xf32> to vector<8x32xf32>
    %60 = arith.addf %57, %59 : vector<8x32xf32>
    %61 = vector.extract_strided_slice %55 {offsets = [2, 0, 0], sizes = [1, 8, 32], strides = [1, 1, 1]} : vector<4x8x32xf32> to vector<1x8x32xf32>
    %62 = vector.shape_cast %61 : vector<1x8x32xf32> to vector<8x32xf32>
    %63 = arith.addf %60, %62 : vector<8x32xf32>
    %64 = vector.extract_strided_slice %55 {offsets = [3, 0, 0], sizes = [1, 8, 32], strides = [1, 1, 1]} : vector<4x8x32xf32> to vector<1x8x32xf32>
    %65 = vector.shape_cast %64 : vector<1x8x32xf32> to vector<8x32xf32>
    %66 = arith.addf %63, %65 : vector<8x32xf32>
    %67 = arith.addf %4, %66 : vector<8x32xf32>
    %c0_28 = arith.constant 0 : index
    %c0_29 = arith.constant 0 : index
    %c0_30 = arith.constant 0 : index
    %68 = vector.load %arg7[%c0_28, %c0_29, %c0_30] : memref<1x1x32xf32, #tpu.memory_space<vmem>>, vector<1x1x32xf32>
    %69 = vector.shape_cast %68 : vector<1x1x32xf32> to vector<1x32xf32>
    %c0_31 = arith.constant 0 : index
    %c0_32 = arith.constant 0 : index
    %c0_33 = arith.constant 0 : index
    %70 = vector.load %arg8[%c0_31, %c0_32, %c0_33] : memref<1x1x32xf32, #tpu.memory_space<vmem>>, vector<1x1x32xf32>
    %71 = vector.shape_cast %70 : vector<1x1x32xf32> to vector<1x32xf32>
    %cst_34 = arith.constant dense<0.000000e+00> : vector<8xf32>
    %72 = vector.multi_reduction <add>, %67, %cst_34 [1] : vector<8x32xf32> to vector<8xf32>
    %73 = vector.shape_cast %72 : vector<8xf32> to vector<8x1xf32>
    %cst_35 = arith.constant 3.200000e+01 : f32
    %74 = vector.broadcast %cst_35 : f32 to vector<8x1xf32>
    %75 = arith.divf %73, %74 : vector<8x1xf32>
    %76 = vector.broadcast %75 : vector<8x1xf32> to vector<8x32xf32>
    %77 = arith.subf %67, %76 : vector<8x32xf32>
    %78 = arith.mulf %77, %77 : vector<8x32xf32>
    %cst_36 = arith.constant dense<0.000000e+00> : vector<8xf32>
    %79 = vector.multi_reduction <add>, %78, %cst_36 [1] : vector<8x32xf32> to vector<8xf32>
    %80 = vector.shape_cast %79 : vector<8xf32> to vector<8x1xf32>
    %cst_37 = arith.constant 3.200000e+01 : f32
    %81 = vector.broadcast %cst_37 : f32 to vector<8x1xf32>
    %82 = arith.divf %80, %81 : vector<8x1xf32>
    %83 = vector.broadcast %75 : vector<8x1xf32> to vector<8x32xf32>
    %84 = arith.subf %67, %83 : vector<8x32xf32>
    %cst_38 = arith.constant 9.99999974E-6 : f32
    %85 = vector.broadcast %cst_38 : f32 to vector<8x1xf32>
    %86 = arith.addf %82, %85 : vector<8x1xf32>
    %87 = math.rsqrt %86 : vector<8x1xf32>
    %88 = vector.broadcast %87 : vector<8x1xf32> to vector<8x32xf32>
    %89 = arith.mulf %84, %88 : vector<8x32xf32>
    %90 = vector.broadcast %69 : vector<1x32xf32> to vector<8x32xf32>
    %91 = arith.mulf %89, %90 : vector<8x32xf32>
    %92 = vector.broadcast %71 : vector<1x32xf32> to vector<8x32xf32>
    %93 = arith.addf %91, %92 : vector<8x32xf32>
    %c0_39 = arith.constant 0 : index
    %c0_40 = arith.constant 0 : index
    %c0_41 = arith.constant 0 : index
    %94 = vector.load %arg9[%c0_39, %c0_40, %c0_41] : memref<1x32x128xf32, #tpu.memory_space<vmem>>, vector<1x32x128xf32>
    %95 = vector.shape_cast %94 : vector<1x32x128xf32> to vector<32x128xf32>
    %cst_42 = arith.constant dense<0.000000e+00> : vector<8x128xf32>
    %96 = tpu.matmul %93, %95, %cst_42 {dimension_numbers = #tpu.dot_dimension_numbers<[1], [0], [0], [1], [0, 0, 1, 1], [], []>} : vector<8x32xf32>, vector<32x128xf32>, vector<8x128xf32> -> vector<8x128xf32>
    %c0_43 = arith.constant 0 : index
    %c0_44 = arith.constant 0 : index
    %c0_45 = arith.constant 0 : index
    %97 = vector.load %arg10[%c0_43, %c0_44, %c0_45] : memref<1x1x128xf32, #tpu.memory_space<vmem>>, vector<1x1x128xf32>
    %98 = vector.shape_cast %97 : vector<1x1x128xf32> to vector<1x128xf32>
    %99 = vector.broadcast %98 : vector<1x128xf32> to vector<8x128xf32>
    %100 = arith.addf %96, %99 : vector<8x128xf32>
    %cst_46 = arith.constant 5.000000e-01 : f32
    %101 = vector.broadcast %cst_46 : f32 to vector<8x128xf32>
    %102 = arith.mulf %101, %100 : vector<8x128xf32>
    %cst_47 = arith.constant 0.707106769 : f32
    %103 = vector.broadcast %cst_47 : f32 to vector<8x128xf32>
    %104 = arith.mulf %100, %103 : vector<8x128xf32>
    %105 = math.erf %104 : vector<8x128xf32>
    %cst_48 = arith.constant 1.000000e+00 : f32
    %106 = vector.broadcast %cst_48 : f32 to vector<8x128xf32>
    %107 = arith.addf %106, %105 : vector<8x128xf32>
    %108 = arith.mulf %102, %107 : vector<8x128xf32>
    %c0_49 = arith.constant 0 : index
    %c0_50 = arith.constant 0 : index
    %c0_51 = arith.constant 0 : index
    %109 = vector.load %arg11[%c0_49, %c0_50, %c0_51] : memref<1x128x32xf32, #tpu.memory_space<vmem>>, vector<1x128x32xf32>
    %110 = vector.shape_cast %109 : vector<1x128x32xf32> to vector<128x32xf32>
    %cst_52 = arith.constant dense<0.000000e+00> : vector<8x32xf32>
    %111 = tpu.matmul %108, %110, %cst_52 {dimension_numbers = #tpu.dot_dimension_numbers<[1], [0], [0], [1], [0, 0, 1, 1], [], []>} : vector<8x128xf32>, vector<128x32xf32>, vector<8x32xf32> -> vector<8x32xf32>
    %112 = arith.addf %67, %111 : vector<8x32xf32>
    %c0_53 = arith.constant 0 : index
    %c0_54 = arith.constant 0 : index
    %c0_55 = arith.constant 0 : index
    %113 = vector.load %arg12[%c0_53, %c0_54, %c0_55] : memref<1x1x32xf32, #tpu.memory_space<vmem>>, vector<1x1x32xf32>
    %114 = vector.shape_cast %113 : vector<1x1x32xf32> to vector<1x32xf32>
    %115 = vector.broadcast %114 : vector<1x32xf32> to vector<8x32xf32>
    %116 = arith.addf %112, %115 : vector<8x32xf32>
    %c1_i32 = arith.constant 1 : i32
    %117 = arith.cmpi slt, %arg1, %c1_i32 : i32
    %118 = arith.extui %117 : i1 to i32
    %c0_i32_56 = arith.constant 0 : i32
    %119 = arith.cmpi ne, %118, %c0_i32_56 : i32
    scf.if %119 {
      %c0_59 = arith.constant 0 : index
      %c0_60 = arith.constant 0 : index
      %c0_61 = arith.constant 0 : index
      %123 = vector.load %arg15[%c0_59, %c0_60, %c0_61] : memref<1x8x32xf32, #tpu.memory_space<vmem>>, vector<1x8x32xf32>
      %124 = vector.shape_cast %123 : vector<1x8x32xf32> to vector<8x32xf32>
      %125 = vector.shape_cast %116 : vector<8x32xf32> to vector<1x8x32xf32>
      tpu.vector_store %arg15[%c0_59, %c0_60, %c0_61], %125 {strides = array<i32>} : memref<1x8x32xf32, #tpu.memory_space<vmem>>, vector<1x8x32xf32>,
    } else {
    }
    %c1_i32_57 = arith.constant 1 : i32
    %120 = arith.cmpi eq, %arg1, %c1_i32_57 : i32
    %121 = arith.extui %120 : i1 to i32
    %c0_i32_58 = arith.constant 0 : i32
    %122 = arith.cmpi ne, %121, %c0_i32_58 : i32
    scf.if %122 {
      %c0_59 = arith.constant 0 : index
      %c0_60 = arith.constant 0 : index
      %123 = vector.load %arg13[%c0_59, %c0_60] : memref<1x32xf32, #tpu.memory_space<vmem>>, vector<1x32xf32>
      %c0_61 = arith.constant 0 : index
      %c0_62 = arith.constant 0 : index
      %124 = vector.load %arg14[%c0_61, %c0_62] : memref<1x32xf32, #tpu.memory_space<vmem>>, vector<1x32xf32>
      %cst_63 = arith.constant dense<0.000000e+00> : vector<8xf32>
      %125 = vector.multi_reduction <add>, %116, %cst_63 [1] : vector<8x32xf32> to vector<8xf32>
      %126 = vector.shape_cast %125 : vector<8xf32> to vector<8x1xf32>
      %cst_64 = arith.constant 3.200000e+01 : f32
      %127 = vector.broadcast %cst_64 : f32 to vector<8x1xf32>
      %128 = arith.divf %126, %127 : vector<8x1xf32>
      %129 = vector.broadcast %128 : vector<8x1xf32> to vector<8x32xf32>
      %130 = arith.subf %116, %129 : vector<8x32xf32>
      %131 = arith.mulf %130, %130 : vector<8x32xf32>
      %cst_65 = arith.constant dense<0.000000e+00> : vector<8xf32>
      %132 = vector.multi_reduction <add>, %131, %cst_65 [1] : vector<8x32xf32> to vector<8xf32>
      %133 = vector.shape_cast %132 : vector<8xf32> to vector<8x1xf32>
      %cst_66 = arith.constant 3.200000e+01 : f32
      %134 = vector.broadcast %cst_66 : f32 to vector<8x1xf32>
      %135 = arith.divf %133, %134 : vector<8x1xf32>
      %136 = vector.broadcast %128 : vector<8x1xf32> to vector<8x32xf32>
      %137 = arith.subf %116, %136 : vector<8x32xf32>
      %cst_67 = arith.constant 9.99999974E-6 : f32
      %138 = vector.broadcast %cst_67 : f32 to vector<8x1xf32>
      %139 = arith.addf %135, %138 : vector<8x1xf32>
      %140 = math.rsqrt %139 : vector<8x1xf32>
      %141 = vector.broadcast %140 : vector<8x1xf32> to vector<8x32xf32>
      %142 = arith.mulf %137, %141 : vector<8x32xf32>
      %143 = vector.broadcast %123 : vector<1x32xf32> to vector<8x32xf32>
      %144 = arith.mulf %142, %143 : vector<8x32xf32>
      %145 = vector.broadcast %124 : vector<1x32xf32> to vector<8x32xf32>
      %146 = arith.addf %144, %145 : vector<8x32xf32>
      %c0_68 = arith.constant 0 : index
      %c0_69 = arith.constant 0 : index
      %c0_70 = arith.constant 0 : index
      %147 = vector.load %arg15[%c0_68, %c0_69, %c0_70] : memref<1x8x32xf32, #tpu.memory_space<vmem>>, vector<1x8x32xf32>
      %148 = vector.shape_cast %147 : vector<1x8x32xf32> to vector<8x32xf32>
      %149 = vector.shape_cast %146 : vector<8x32xf32> to vector<1x8x32xf32>
      tpu.vector_store %arg15[%c0_68, %c0_69, %c0_70], %149 {strides = array<i32>} : memref<1x8x32xf32, #tpu.memory_space<vmem>>, vector<1x8x32xf32>,
    } else {
    }
    return
  }
  func.func @transform_0(%arg0: i32, %arg1: i32) -> (i32, i32, i32) {
    %c0_i32 = arith.constant 0 : i32
    %c0_i32_0 = arith.constant 0 : i32
    %c0_i32_1 = arith.constant 0 : i32
    return %arg0, %c0_i32, %c0_i32_0 : i32, i32, i32
  }
  func.func @transform_1(%arg0: i32, %arg1: i32) -> (i32, i32, i32) {
    %c0_i32 = arith.constant 0 : i32
    %c0_i32_0 = arith.constant 0 : i32
    %c0_i32_1 = arith.constant 0 : i32
    return %arg1, %c0_i32, %c0_i32_0 : i32, i32, i32
  }
  func.func @transform_2(%arg0: i32, %arg1: i32) -> (i32, i32, i32) {
    %c0_i32 = arith.constant 0 : i32
    %c0_i32_0 = arith.constant 0 : i32
    %c0_i32_1 = arith.constant 0 : i32
    return %arg1, %c0_i32, %c0_i32_0 : i32, i32, i32
  }
  func.func @transform_3(%arg0: i32, %arg1: i32) -> (i32, i32, i32, i32) {
    %c0_i32 = arith.constant 0 : i32
    %c0_i32_0 = arith.constant 0 : i32
    %c0_i32_1 = arith.constant 0 : i32
    %c0_i32_2 = arith.constant 0 : i32
    return %arg1, %c0_i32, %c0_i32_0, %c0_i32_1 : i32, i32, i32, i32
  }
  func.func @transform_4(%arg0: i32, %arg1: i32) -> (i32, i32, i32, i32) {
    %c0_i32 = arith.constant 0 : i32
    %c0_i32_0 = arith.constant 0 : i32
    %c0_i32_1 = arith.constant 0 : i32
    %c0_i32_2 = arith.constant 0 : i32
    return %arg1, %c0_i32, %c0_i32_0, %c0_i32_1 : i32, i32, i32, i32
  }
  func.func @transform_5(%arg0: i32, %arg1: i32) -> (i32, i32, i32) {
    %c0_i32 = arith.constant 0 : i32
    %c0_i32_0 = arith.constant 0 : i32
    %c0_i32_1 = arith.constant 0 : i32
    return %arg1, %c0_i32, %c0_i32_0 : i32, i32, i32
  }
  func.func @transform_6(%arg0: i32, %arg1: i32) -> (i32, i32, i32) {
    %c0_i32 = arith.constant 0 : i32
    %c0_i32_0 = arith.constant 0 : i32
    %c0_i32_1 = arith.constant 0 : i32
    return %arg1, %c0_i32, %c0_i32_0 : i32, i32, i32
  }
  func.func @transform_7(%arg0: i32, %arg1: i32) -> (i32, i32, i32) {
    %c0_i32 = arith.constant 0 : i32
    %c0_i32_0 = arith.constant 0 : i32
    %c0_i32_1 = arith.constant 0 : i32
    return %arg1, %c0_i32, %c0_i32_0 : i32, i32, i32
  }
  func.func @transform_8(%arg0: i32, %arg1: i32) -> (i32, i32, i32) {
    %c0_i32 = arith.constant 0 : i32
    %c0_i32_0 = arith.constant 0 : i32
    %c0_i32_1 = arith.constant 0 : i32
    return %arg1, %c0_i32, %c0_i32_0 : i32, i32, i32
  }
  func.func @transform_9(%arg0: i32, %arg1: i32) -> (i32, i32, i32) {
    %c0_i32 = arith.constant 0 : i32
    %c0_i32_0 = arith.constant 0 : i32
    %c0_i32_1 = arith.constant 0 : i32
    return %arg1, %c0_i32, %c0_i32_0 : i32, i32, i32
  }
  func.func @transform_10(%arg0: i32, %arg1: i32) -> (i32, i32, i32) {
    %c0_i32 = arith.constant 0 : i32
    %c0_i32_0 = arith.constant 0 : i32
    %c0_i32_1 = arith.constant 0 : i32
    return %arg1, %c0_i32, %c0_i32_0 : i32, i32, i32
  }
  func.func @transform_11(%arg0: i32, %arg1: i32) -> (i32, i32) {
    %c0_i32 = arith.constant 0 : i32
    %c0_i32_0 = arith.constant 0 : i32
    %c0_i32_1 = arith.constant 0 : i32
    return %c0_i32, %c0_i32_0 : i32, i32
  }
  func.func @transform_12(%arg0: i32, %arg1: i32) -> (i32, i32) {
    %c0_i32 = arith.constant 0 : i32
    %c0_i32_0 = arith.constant 0 : i32
    %c0_i32_1 = arith.constant 0 : i32
    return %c0_i32, %c0_i32_0 : i32, i32
  }
  func.func @transform_13(%arg0: i32, %arg1: i32) -> (i32, i32, i32) {
    %c0_i32 = arith.constant 0 : i32
    %c0_i32_0 = arith.constant 0 : i32
    %c0_i32_1 = arith.constant 0 : i32
    return %arg0, %c0_i32, %c0_i32_0 : i32, i32, i32
  }
}

</mosaic_0001>

<llo_original>
// kernel: tpu_custom_call.1
$region0: #{tpu_custom_call.1}
  #allocation0 [shape = 'u32[]', space=smem, size = 0x4, offset = 0x4, fixed_abs, tag = 'smem constant byte address 0x4 - core index']
  #allocation1 [shape = 'u32[72,128]{1,0:T(1,128)}', space=vmem, size = 0x9000, scoped, tag = 'internal scratch']
  %s0 = inlined_call_operand.vmem [shape: f32[2,8,32], index: 0, kind: input, shape index: {}]
  %s1 = inlined_call_operand.vmem [shape: f32[2,1,32], index: 1, kind: input, shape index: {}]
  %s2 = inlined_call_operand.vmem [shape: f32[2,1,32], index: 2, kind: input, shape index: {}]
  %s3 = inlined_call_operand.vmem [shape: f32[2,12,32,8], index: 3, kind: input, shape index: {}]
  %s4 = inlined_call_operand.vmem [shape: f32[2,4,8,32], index: 4, kind: input, shape index: {}]
  %s5 = inlined_call_operand.vmem [shape: f32[2,1,32], index: 5, kind: input, shape index: {}]
  %s6 = inlined_call_operand.vmem [shape: f32[2,1,32], index: 6, kind: input, shape index: {}]
  %s7 = inlined_call_operand.vmem [shape: f32[2,32,128], index: 7, kind: input, shape index: {}]
  %s8 = inlined_call_operand.vmem [shape: f32[2,1,128], index: 8, kind: input, shape index: {}]
  %s9 = inlined_call_operand.vmem [shape: f32[2,128,32], index: 9, kind: input, shape index: {}]
  %s10 = inlined_call_operand.vmem [shape: f32[2,1,32], index: 10, kind: input, shape index: {}]
  %s11 = inlined_call_operand.vmem [shape: f32[1,32], index: 11, kind: input, shape index: {}]
  %s12 = inlined_call_operand.vmem [shape: f32[1,32], index: 12, kind: input, shape index: {}]
  %s13 = inlined_call_operand.hbm [shape: f32[2,8,32], index: 13, kind: output, shape index: {}]
  %s14 = sld [smem:[#allocation0]]
  $region97: #{tpu_custom_call.1} parent=0
    _
  %s16 = ssub.s32 1, %s14
  %s17 = scalar_select 0, %s16, %s14
  $region1: #{tpu_custom_call.1} parent=0
    #allocation2 [shape = 'u8[8192]{0}', space=vmem, size = 0x2000, scoped, tag = 'output window, operand 0']
    #allocation3 [shape = 's32[2]{0}', space=sflag, size = 0x8, scoped, tag = 'scoped memory for tpu_custom_call.1']
    %18 = vsyncpa [#allocation3], 0
    %s19 = scalar_lea.sflag [#allocation3], 1
    %20 = vsyncpa %s19, 0
    loop: start=0, step=1, limit=6
    $region2: #{tpu_custom_call.1} parent=1 // loop_pre_header
      _
    $region3: #{tpu_custom_call.1} parent=1 // loop_header
      %s22 = sphi 0, %s26
      %p23 = scmp.ge.s32.totalorder %s22, 6
      %s29 = sphi 0, %s41
      %s30 = sphi 0, %s37
      %s31 = sphi 0, %s29
      %s32 = sphi 0, %s30
      %s33 = sphi 0, %s31
      %s34 = sphi 0, %s32
      %s44 = sphi 0, %s46
      %s47 = sphi 0, %s44
      %s48 = sphi 0, %s47
      %s64 = sphi 0, %s48
      %s70 = sphi 0, %s72
      %s73 = sphi 0, %s70
      %s74 = sphi 0, %s73
      %s90 = sphi 0, %s74
      %s96 = sphi 0, %s98
      %s99 = sphi 0, %s96
      %s100 = sphi 0, %s99
      %s116 = sphi 0, %s100
      %s122 = sphi 0, %s124
      %s125 = sphi 0, %s122
      %s126 = sphi 0, %s125
      %s142 = sphi 0, %s126
      %s148 = sphi 0, %s150
      %s151 = sphi 0, %s148
      %s152 = sphi 0, %s151
      %s168 = sphi 0, %s152
      %s174 = sphi 0, %s176
      %s177 = sphi 0, %s174
      %s178 = sphi 0, %s177
      %s194 = sphi 0, %s178
      %s200 = sphi 0, %s202
      %s203 = sphi 0, %s200
      %s204 = sphi 0, %s203
      %s220 = sphi 0, %s204
      %s226 = sphi 0, %s228
      %s229 = sphi 0, %s226
      %s230 = sphi 0, %s229
      %s246 = sphi 0, %s230
      %s252 = sphi 0, %s254
      %s255 = sphi 0, %s252
      %s256 = sphi 0, %s255
      %s272 = sphi 0, %s256
      %s278 = sphi 0, %s280
      %s281 = sphi 0, %s278
      %s282 = sphi 0, %s281
      %s298 = sphi 0, %s282
      %s304 = sphi 0, %s306
      %s307 = sphi 0, %s304
      %s308 = sphi 0, %s307
      %s324 = sphi 0, %s308
      %s328 = sphi 0, %s328
      %s330 = sphi 0, %s328
      %s331 = sphi 0, %s330
      %s345 = sphi 0, %s331
      %s349 = sphi 0, %s349
      %s351 = sphi 0, %s349
      %s352 = sphi 0, %s351
      %s366 = sphi 0, %s352
      %s372 = sphi 0, %s374
      %s375 = sphi 0, %s372
      %s376 = sphi 0, %s375
      %s392 = sphi 0, %s376
    $region4: #{tpu_custom_call.1} parent=1 // loop_header_branch
      %25 = sbr.rel (%p23) target = $region8
    $region5: #{tpu_custom_call.1} parent=1 // loop_body
      %s27 = ssub.s32 %s22, 1
      %s28 = ssub.s32 %s22, 2
      %s35 = sadd.s32 1, %s30
      %p36 = scmp.ge.s32.totalorder %s35, 2
      %s37 = scalar_select %p36, 0, %s35
      %s38 = sadd.s32 1, %s29
      %s39 = scalar_select %p36, %s38, %s29
      %p40 = scmp.ge.s32.totalorder %s39, 2
      %s41 = scalar_select %p40, 0, %s39
      %s42 = ssub.s32 %s29, %s41
      %p43 = scmp.eq.s32.totalorder %s42, 0
      %s45 = sadd.s32 %s44, 1
      %s46 = scalar_select %p43, %s44, %s45
      %p49 = pneg %p43
      %p50 = scmp.eq.s32.totalorder %s22, 3
      %p51 = por %p49, %p50
      %p52 = scmp.ne.s32.totalorder %s44, %s47
      %p53 = scmp.eq.s32.totalorder %s22, 0
      %p54 = por %p52, %p53
      %p55 = scmp.ne.s32.totalorder %s44, %s47
      %p56 = scmp.eq.s32.totalorder %s27, 3
      %p57 = por %p55, %p56
      %p58 = scmp.ne.s32.totalorder %s47, %s48
      %p59 = scmp.eq.s32.totalorder %s27, 0
      %p60 = por %p58, %p59
      %p61 = scmp.ne.s32.totalorder %s47, %s48
      %p62 = scmp.eq.s32.totalorder %s28, 3
      %p63 = por %p61, %p62
      %p65 = scmp.ne.s32.totalorder %s48, %s64
      %p66 = scmp.eq.s32.totalorder %s28, 0
      %p67 = por %p65, %p66
      %s68 = ssub.s32 %s30, %s37
      %p69 = scmp.eq.s32.totalorder %s68, 0
      %s71 = sadd.s32 %s70, 1
      %s72 = scalar_select %p69, %s70, %s71
      %p75 = pneg %p69
      %p76 = scmp.eq.s32.totalorder %s22, 3
      %p77 = por %p75, %p76
      %p78 = scmp.ne.s32.totalorder %s70, %s73
      %p79 = scmp.eq.s32.totalorder %s22, 0
      %p80 = por %p78, %p79
      %p81 = scmp.ne.s32.totalorder %s70, %s73
      %p82 = scmp.eq.s32.totalorder %s27, 3
      %p83 = por %p81, %p82
      %p84 = scmp.ne.s32.totalorder %s73, %s74
      %p85 = scmp.eq.s32.totalorder %s27, 0
      %p86 = por %p84, %p85
      %p87 = scmp.ne.s32.totalorder %s73, %s74
      %p88 = scmp.eq.s32.totalorder %s28, 3
      %p89 = por %p87, %p88
      %p91 = scmp.ne.s32.totalorder %s74, %s90
      %p92 = scmp.eq.s32.totalorder %s28, 0
      %p93 = por %p91, %p92
      %s94 = ssub.s32 %s30, %s37
      %p95 = scmp.eq.s32.totalorder %s94, 0
      %s97 = sadd.s32 %s96, 1
      %s98 = scalar_select %p95, %s96, %s97
      %p101 = pneg %p95
      %p102 = scmp.eq.s32.totalorder %s22, 3
      %p103 = por %p101, %p102
      %p104 = scmp.ne.s32.totalorder %s96, %s99
      %p105 = scmp.eq.s32.totalorder %s22, 0
      %p106 = por %p104, %p105
      %p107 = scmp.ne.s32.totalorder %s96, %s99
      %p108 = scmp.eq.s32.totalorder %s27, 3
      %p109 = por %p107, %p108
      %p110 = scmp.ne.s32.totalorder %s99, %s100
      %p111 = scmp.eq.s32.totalorder %s27, 0
      %p112 = por %p110, %p111
      %p113 = scmp.ne.s32.totalorder %s99, %s100
      %p114 = scmp.eq.s32.totalorder %s28, 3
      %p115 = por %p113, %p114
      %p117 = scmp.ne.s32.totalorder %s100, %s116
      %p118 = scmp.eq.s32.totalorder %s28, 0
      %p119 = por %p117, %p118
      %s120 = ssub.s32 %s30, %s37
      %p121 = scmp.eq.s32.totalorder %s120, 0
      %s123 = sadd.s32 %s122, 1
      %s124 = scalar_select %p121, %s122, %s123
      %p127 = pneg %p121
      %p128 = scmp.eq.s32.totalorder %s22, 3
      %p129 = por %p127, %p128
      %p130 = scmp.ne.s32.totalorder %s122, %s125
      %p131 = scmp.eq.s32.totalorder %s22, 0
      %p132 = por %p130, %p131
      %p133 = scmp.ne.s32.totalorder %s122, %s125
      %p134 = scmp.eq.s32.totalorder %s27, 3
      %p135 = por %p133, %p134
      %p136 = scmp.ne.s32.totalorder %s125, %s126
      %p137 = scmp.eq.s32.totalorder %s27, 0
      %p138 = por %p136, %p137
      %p139 = scmp.ne.s32.totalorder %s125, %s126
      %p140 = scmp.eq.s32.totalorder %s28, 3
      %p141 = por %p139, %p140
      %p143 = scmp.ne.s32.totalorder %s126, %s142
      %p144 = scmp.eq.s32.totalorder %s28, 0
      %p145 = por %p143, %p144
      %s146 = ssub.s32 %s30, %s37
      %p147 = scmp.eq.s32.totalorder %s146, 0
      %s149 = sadd.s32 %s148, 1
      %s150 = scalar_select %p147, %s148, %s149
      %p153 = pneg %p147
      %p154 = scmp.eq.s32.totalorder %s22, 3
      %p155 = por %p153, %p154
      %p156 = scmp.ne.s32.totalorder %s148, %s151
      %p157 = scmp.eq.s32.totalorder %s22, 0
      %p158 = por %p156, %p157
      %p159 = scmp.ne.s32.totalorder %s148, %s151
      %p160 = scmp.eq.s32.totalorder %s27, 3
      %p161 = por %p159, %p160
      %p162 = scmp.ne.s32.totalorder %s151, %s152
      %p163 = scmp.eq.s32.totalorder %s27, 0
      %p164 = por %p162, %p163
      %p165 = scmp.ne.s32.totalorder %s151, %s152
      %p166 = scmp.eq.s32.totalorder %s28, 3
      %p167 = por %p165, %p166
      %p169 = scmp.ne.s32.totalorder %s152, %s168
      %p170 = scmp.eq.s32.totalorder %s28, 0
      %p171 = por %p169, %p170
      %s172 = ssub.s32 %s30, %s37
      %p173 = scmp.eq.s32.totalorder %s172, 0
      %s175 = sadd.s32 %s174, 1
      %s176 = scalar_select %p173, %s174, %s175
      %p179 = pneg %p173
      %p180 = scmp.eq.s32.totalorder %s22, 3
      %p181 = por %p179, %p180
      %p182 = scmp.ne.s32.totalorder %s174, %s177
      %p183 = scmp.eq.s32.totalorder %s22, 0
      %p184 = por %p182, %p183
      %p185 = scmp.ne.s32.totalorder %s174, %s177
      %p186 = scmp.eq.s32.totalorder %s27, 3
      %p187 = por %p185, %p186
      %p188 = scmp.ne.s32.totalorder %s177, %s178
      %p189 = scmp.eq.s32.totalorder %s27, 0
      %p190 = por %p188, %p189
      %p191 = scmp.ne.s32.totalorder %s177, %s178
      %p192 = scmp.eq.s32.totalorder %s28, 3
      %p193 = por %p191, %p192
      %p195 = scmp.ne.s32.totalorder %s178, %s194
      %p196 = scmp.eq.s32.totalorder %s28, 0
      %p197 = por %p195, %p196
      %s198 = ssub.s32 %s30, %s37
      %p199 = scmp.eq.s32.totalorder %s198, 0
      %s201 = sadd.s32 %s200, 1
      %s202 = scalar_select %p199, %s200, %s201
      %p205 = pneg %p199
      %p206 = scmp.eq.s32.totalorder %s22, 3
      %p207 = por %p205, %p206
      %p208 = scmp.ne.s32.totalorder %s200, %s203
      %p209 = scmp.eq.s32.totalorder %s22, 0
      %p210 = por %p208, %p209
      %p211 = scmp.ne.s32.totalorder %s200, %s203
      %p212 = scmp.eq.s32.totalorder %s27, 3
      %p213 = por %p211, %p212
      %p214 = scmp.ne.s32.totalorder %s203, %s204
      %p215 = scmp.eq.s32.totalorder %s27, 0
      %p216 = por %p214, %p215
      %p217 = scmp.ne.s32.totalorder %s203, %s204
      %p218 = scmp.eq.s32.totalorder %s28, 3
      %p219 = por %p217, %p218
      %p221 = scmp.ne.s32.totalorder %s204, %s220
      %p222 = scmp.eq.s32.totalorder %s28, 0
      %p223 = por %p221, %p222
      %s224 = ssub.s32 %s30, %s37
      %p225 = scmp.eq.s32.totalorder %s224, 0
      %s227 = sadd.s32 %s226, 1
      %s228 = scalar_select %p225, %s226, %s227
      %p231 = pneg %p225
      %p232 = scmp.eq.s32.totalorder %s22, 3
      %p233 = por %p231, %p232
      %p234 = scmp.ne.s32.totalorder %s226, %s229
      %p235 = scmp.eq.s32.totalorder %s22, 0
      %p236 = por %p234, %p235
      %p237 = scmp.ne.s32.totalorder %s226, %s229
      %p238 = scmp.eq.s32.totalorder %s27, 3
      %p239 = por %p237, %p238
      %p240 = scmp.ne.s32.totalorder %s229, %s230
      %p241 = scmp.eq.s32.totalorder %s27, 0
      %p242 = por %p240, %p241
      %p243 = scmp.ne.s32.totalorder %s229, %s230
      %p244 = scmp.eq.s32.totalorder %s28, 3
      %p245 = por %p243, %p244
      %p247 = scmp.ne.s32.totalorder %s230, %s246
      %p248 = scmp.eq.s32.totalorder %s28, 0
      %p249 = por %p247, %p248
      %s250 = ssub.s32 %s30, %s37
      %p251 = scmp.eq.s32.totalorder %s250, 0
      %s253 = sadd.s32 %s252, 1
      %s254 = scalar_select %p251, %s252, %s253
      %p257 = pneg %p251
      %p258 = scmp.eq.s32.totalorder %s22, 3
      %p259 = por %p257, %p258
      %p260 = scmp.ne.s32.totalorder %s252, %s255
      %p261 = scmp.eq.s32.totalorder %s22, 0
      %p262 = por %p260, %p261
      %p263 = scmp.ne.s32.totalorder %s252, %s255
      %p264 = scmp.eq.s32.totalorder %s27, 3
      %p265 = por %p263, %p264
      %p266 = scmp.ne.s32.totalorder %s255, %s256
      %p267 = scmp.eq.s32.totalorder %s27, 0
      %p268 = por %p266, %p267
      %p269 = scmp.ne.s32.totalorder %s255, %s256
      %p270 = scmp.eq.s32.totalorder %s28, 3
      %p271 = por %p269, %p270
      %p273 = scmp.ne.s32.totalorder %s256, %s272
      %p274 = scmp.eq.s32.totalorder %s28, 0
      %p275 = por %p273, %p274
      %s276 = ssub.s32 %s30, %s37
      %p277 = scmp.eq.s32.totalorder %s276, 0
      %s279 = sadd.s32 %s278, 1
      %s280 = scalar_select %p277, %s278, %s279
      %p283 = pneg %p277
      %p284 = scmp.eq.s32.totalorder %s22, 3
      %p285 = por %p283, %p284
      %p286 = scmp.ne.s32.totalorder %s278, %s281
      %p287 = scmp.eq.s32.totalorder %s22, 0
      %p288 = por %p286, %p287
      %p289 = scmp.ne.s32.totalorder %s278, %s281
      %p290 = scmp.eq.s32.totalorder %s27, 3
      %p291 = por %p289, %p290
      %p292 = scmp.ne.s32.totalorder %s281, %s282
      %p293 = scmp.eq.s32.totalorder %s27, 0
      %p294 = por %p292, %p293
      %p295 = scmp.ne.s32.totalorder %s281, %s282
      %p296 = scmp.eq.s32.totalorder %s28, 3
      %p297 = por %p295, %p296
      %p299 = scmp.ne.s32.totalorder %s282, %s298
      %p300 = scmp.eq.s32.totalorder %s28, 0
      %p301 = por %p299, %p300
      %s302 = ssub.s32 %s30, %s37
      %p303 = scmp.eq.s32.totalorder %s302, 0
      %s305 = sadd.s32 %s304, 1
      %s306 = scalar_select %p303, %s304, %s305
      %p309 = pneg %p303
      %p310 = scmp.eq.s32.totalorder %s22, 3
      %p311 = por %p309, %p310
      %p312 = scmp.ne.s32.totalorder %s304, %s307
      %p313 = scmp.eq.s32.totalorder %s22, 0
      %p314 = por %p312, %p313
      %p315 = scmp.ne.s32.totalorder %s304, %s307
      %p316 = scmp.eq.s32.totalorder %s27, 3
      %p317 = por %p315, %p316
      %p318 = scmp.ne.s32.totalorder %s307, %s308
      %p319 = scmp.eq.s32.totalorder %s27, 0
      %p320 = por %p318, %p319
      %p321 = scmp.ne.s32.totalorder %s307, %s308
      %p322 = scmp.eq.s32.totalorder %s28, 3
      %p323 = por %p321, %p322
      %p325 = scmp.ne.s32.totalorder %s308, %s324
      %p326 = scmp.eq.s32.totalorder %s28, 0
      %p327 = por %p325, %p326
      %s329 = sadd.s32 %s328, 1
      %p332 = scmp.eq.s32.totalorder %s22, 3
      %p333 = scmp.ne.s32.totalorder %s328, %s330
      %p334 = scmp.eq.s32.totalorder %s22, 0
      %p335 = por %p333, %p334
      %p336 = scmp.ne.s32.totalorder %s328, %s330
      %p337 = scmp.eq.s32.totalorder %s27, 3
      %p338 = por %p336, %p337
      %p339 = scmp.ne.s32.totalorder %s330, %s331
      %p340 = scmp.eq.s32.totalorder %s27, 0
      %p341 = por %p339, %p340
      %p342 = scmp.ne.s32.totalorder %s330, %s331
      %p343 = scmp.eq.s32.totalorder %s28, 3
      %p344 = por %p342, %p343
      %p346 = scmp.ne.s32.totalorder %s331, %s345
      %p347 = scmp.eq.s32.totalorder %s28, 0
      %p348 = por %p346, %p347
      %s350 = sadd.s32 %s349, 1
      %p353 = scmp.eq.s32.totalorder %s22, 3
      %p354 = scmp.ne.s32.totalorder %s349, %s351
      %p355 = scmp.eq.s32.totalorder %s22, 0
      %p356 = por %p354, %p355
      %p357 = scmp.ne.s32.totalorder %s349, %s351
      %p358 = scmp.eq.s32.totalorder %s27, 3
      %p359 = por %p357, %p358
      %p360 = scmp.ne.s32.totalorder %s351, %s352
      %p361 = scmp.eq.s32.totalorder %s27, 0
      %p362 = por %p360, %p361
      %p363 = scmp.ne.s32.totalorder %s351, %s352
      %p364 = scmp.eq.s32.totalorder %s28, 3
      %p365 = por %p363, %p364
      %p367 = scmp.ne.s32.totalorder %s352, %s366
      %p368 = scmp.eq.s32.totalorder %s28, 0
      %p369 = por %p367, %p368
      %s370 = ssub.s32 %s29, %s41
      %p371 = scmp.eq.s32.totalorder %s370, 0
      %s373 = sadd.s32 %s372, 1
      %s374 = scalar_select %p371, %s372, %s373
      %p377 = pneg %p371
      %p378 = scmp.eq.s32.totalorder %s22, 3
      %p379 = por %p377, %p378
      %p380 = scmp.ne.s32.totalorder %s372, %s375
      %p381 = scmp.eq.s32.totalorder %s22, 0
      %p382 = por %p380, %p381
      %p383 = scmp.ne.s32.totalorder %s372, %s375
      %p384 = scmp.eq.s32.totalorder %s27, 3
      %p385 = por %p383, %p384
      %p386 = scmp.ne.s32.totalorder %s375, %s376
      %p387 = scmp.eq.s32.totalorder %s27, 0
      %p388 = por %p386, %p387
      %p389 = scmp.ne.s32.totalorder %s375, %s376
      %p390 = scmp.eq.s32.totalorder %s28, 3
      %p391 = por %p389, %p390
      %p393 = scmp.ne.s32.totalorder %s376, %s392
      %p394 = scmp.eq.s32.totalorder %s28, 0
      %p395 = por %p393, %p394
      %p396 = scmp.le.s32.totalorder 1, %s22
      %p397 = scmp.lt.s32.totalorder %s22, 5
      %p398 = pnand %p396, %p397
      %p399 = pneg %p398
      // Predicated region
      $region9: #{tpu_custom_call.1} parent=5 // pred_check
        _
      $region10: #{tpu_custom_call.1} parent=5 // pred_check_branch
        %401 = sbr.rel (%p398) target = $region12
      $region11: #{tpu_custom_call.1} parent=5 // pred_region
        %s402 = ssub.s32 %s22, 1
        // Predicated region
        $region13: #{tpu_custom_call.1} parent=11 // pred_check
          %p403 = pneg %p341
        $region14: #{tpu_custom_call.1} parent=11 // pred_check_branch
          %405 = sbr.rel (%p403) target = $region16
        $region15: #{tpu_custom_call.1} parent=11 // pred_region
          _
        $region16: #{tpu_custom_call.1} parent=11 // pred_fallthru
          _
        // Predicated region
        $region17: #{tpu_custom_call.1} parent=11 // pred_check
          %p406 = pneg %p362
        $region18: #{tpu_custom_call.1} parent=11 // pred_check_branch
          %408 = sbr.rel (%p406) target = $region20
        $region19: #{tpu_custom_call.1} parent=11 // pred_region
          _
        $region20: #{tpu_custom_call.1} parent=11 // pred_fallthru
          _
      $region12: #{tpu_custom_call.1} parent=5 // pred_fallthru
        _
      %p409 = scmp.lt.s32.totalorder %s22, 4
      // Predicated region
      $region21: #{tpu_custom_call.1} parent=5 // pred_check
        %p410 = pneg %p409
      $region22: #{tpu_custom_call.1} parent=5 // pred_check_branch
        %412 = sbr.rel (%p410) target = $region24
      $region23: #{tpu_custom_call.1} parent=5 // pred_region
        // Predicated region
        $region25: #{tpu_custom_call.1} parent=23 // pred_check
          %p413 = pneg %p54
        $region26: #{tpu_custom_call.1} parent=23 // pred_check_branch
          %415 = sbr.rel (%p413) target = $region28
        $region27: #{tpu_custom_call.1} parent=23 // pred_region
          %p416 = scmp.lt.s32.totalorder %s29, 1
          %s417 = scalar_select %p416, %s29, 1
          %s418 = smul.addr %s417, 8
          %s419 = scalar_lea.vmem %s0, %s418
        $region28: #{tpu_custom_call.1} parent=23 // pred_fallthru
          _
        // Predicated region
        $region29: #{tpu_custom_call.1} parent=23 // pred_check
          %p420 = pneg %p80
        $region30: #{tpu_custom_call.1} parent=23 // pred_check_branch
          %422 = sbr.rel (%p420) target = $region32
        $region31: #{tpu_custom_call.1} parent=23 // pred_region
          %p423 = scmp.lt.s32.totalorder %s30, 1
          %s424 = scalar_select %p423, %s30, 1
          %s425 = scalar_lea.vmem %s1, %s424
        $region32: #{tpu_custom_call.1} parent=23 // pred_fallthru
          _
        // Predicated region
        $region33: #{tpu_custom_call.1} parent=23 // pred_check
          %p426 = pneg %p106
        $region34: #{tpu_custom_call.1} parent=23 // pred_check_branch
          %428 = sbr.rel (%p426) target = $region36
        $region35: #{tpu_custom_call.1} parent=23 // pred_region
          %p429 = scmp.lt.s32.totalorder %s30, 1
          %s430 = scalar_select %p429, %s30, 1
          %s431 = scalar_lea.vmem %s2, %s430
        $region36: #{tpu_custom_call.1} parent=23 // pred_fallthru
          _
        // Predicated region
        $region37: #{tpu_custom_call.1} parent=23 // pred_check
          %p432 = pneg %p132
        $region38: #{tpu_custom_call.1} parent=23 // pred_check_branch
          %434 = sbr.rel (%p432) target = $region40
        $region39: #{tpu_custom_call.1} parent=23 // pred_region
          %p435 = scmp.lt.s32.totalorder %s30, 1
          %s436 = scalar_select %p435, %s30, 1
          %s437 = smul.addr %s436, 48
          %s438 = smul.addr %s437, 8
          %s439 = scalar_lea.vmem %s3, %s438
        $region40: #{tpu_custom_call.1} parent=23 // pred_fallthru
          _
        // Predicated region
        $region41: #{tpu_custom_call.1} parent=23 // pred_check
          %p440 = pneg %p158
        $region42: #{tpu_custom_call.1} parent=23 // pred_check_branch
          %442 = sbr.rel (%p440) target = $region44
        $region43: #{tpu_custom_call.1} parent=23 // pred_region
          %p443 = scmp.lt.s32.totalorder %s30, 1
          %s444 = scalar_select %p443, %s30, 1
          %s445 = smul.addr %s444, 4
          %s446 = smul.addr %s445, 8
          %s447 = scalar_lea.vmem %s4, %s446
        $region44: #{tpu_custom_call.1} parent=23 // pred_fallthru
          _
        // Predicated region
        $region45: #{tpu_custom_call.1} parent=23 // pred_check
          %p448 = pneg %p184
        $region46: #{tpu_custom_call.1} parent=23 // pred_check_branch
          %450 = sbr.rel (%p448) target = $region48
        $region47: #{tpu_custom_call.1} parent=23 // pred_region
          %p451 = scmp.lt.s32.totalorder %s30, 1
          %s452 = scalar_select %p451, %s30, 1
          %s453 = scalar_lea.vmem %s5, %s452
        $region48: #{tpu_custom_call.1} parent=23 // pred_fallthru
          _
        // Predicated region
        $region49: #{tpu_custom_call.1} parent=23 // pred_check
          %p454 = pneg %p210
        $region50: #{tpu_custom_call.1} parent=23 // pred_check_branch
          %456 = sbr.rel (%p454) target = $region52
        $region51: #{tpu_custom_call.1} parent=23 // pred_region
          %p457 = scmp.lt.s32.totalorder %s30, 1
          %s458 = scalar_select %p457, %s30, 1
          %s459 = scalar_lea.vmem %s6, %s458
        $region52: #{tpu_custom_call.1} parent=23 // pred_fallthru
          _
        // Predicated region
        $region53: #{tpu_custom_call.1} parent=23 // pred_check
          %p460 = pneg %p236
        $region54: #{tpu_custom_call.1} parent=23 // pred_check_branch
          %462 = sbr.rel (%p460) target = $region56
        $region55: #{tpu_custom_call.1} parent=23 // pred_region
          %p463 = scmp.lt.s32.totalorder %s30, 1
          %s464 = scalar_select %p463, %s30, 1
          %s465 = smul.addr %s464, 4
          %s466 = smul.addr %s465, 8
          %s467 = scalar_lea.vmem %s7, %s466
        $region56: #{tpu_custom_call.1} parent=23 // pred_fallthru
          _
        // Predicated region
        $region57: #{tpu_custom_call.1} parent=23 // pred_check
          %p468 = pneg %p262
        $region58: #{tpu_custom_call.1} parent=23 // pred_check_branch
          %470 = sbr.rel (%p468) target = $region60
        $region59: #{tpu_custom_call.1} parent=23 // pred_region
          %p471 = scmp.lt.s32.totalorder %s30, 1
          %s472 = scalar_select %p471, %s30, 1
          %s473 = scalar_lea.vmem %s8, %s472
        $region60: #{tpu_custom_call.1} parent=23 // pred_fallthru
          _
        // Predicated region
        $region61: #{tpu_custom_call.1} parent=23 // pred_check
          %p474 = pneg %p288
        $region62: #{tpu_custom_call.1} parent=23 // pred_check_branch
          %476 = sbr.rel (%p474) target = $region64
        $region63: #{tpu_custom_call.1} parent=23 // pred_region
          %p477 = scmp.lt.s32.totalorder %s30, 1
          %s478 = scalar_select %p477, %s30, 1
          %s479 = smul.addr %s478, 16
          %s480 = smul.addr %s479, 8
          %s481 = scalar_lea.vmem %s9, %s480
        $region64: #{tpu_custom_call.1} parent=23 // pred_fallthru
          _
        // Predicated region
        $region65: #{tpu_custom_call.1} parent=23 // pred_check
          %p482 = pneg %p314
        $region66: #{tpu_custom_call.1} parent=23 // pred_check_branch
          %484 = sbr.rel (%p482) target = $region68
        $region67: #{tpu_custom_call.1} parent=23 // pred_region
          %p485 = scmp.lt.s32.totalorder %s30, 1
          %s486 = scalar_select %p485, %s30, 1
          %s487 = scalar_lea.vmem %s10, %s486
        $region68: #{tpu_custom_call.1} parent=23 // pred_fallthru
          _
      $region24: #{tpu_custom_call.1} parent=5 // pred_fallthru
        _
      %p488 = scmp.le.s32.totalorder 1, %s22
      %p489 = scmp.lt.s32.totalorder %s22, 5
      %p490 = pnand %p488, %p489
      %p491 = pneg %p490
      // Predicated region
      $region69: #{tpu_custom_call.1} parent=5 // pred_check
        _
      $region70: #{tpu_custom_call.1} parent=5 // pred_check_branch
        %493 = sbr.rel (%p490) target = $region72
      $region71: #{tpu_custom_call.1} parent=5 // pred_region
        %s494 = ssub.s32 %s22, 1
        %p495 = scmp.lt.s32.totalorder %s31, 1
        %s496 = scalar_select %p495, %s31, 1
        %s497 = smul.addr %s496, 8
        %s498 = scalar_lea.vmem %s0, %s497
        %p499 = pneg %p60
        %p500 = pneg %p57
        %p501 = scmp.lt.s32.totalorder %s32, 1
        %s502 = scalar_select %p501, %s32, 1
        %s503 = scalar_lea.vmem %s1, %s502
        %p504 = pneg %p86
        %p505 = pneg %p83
        %p506 = scmp.lt.s32.totalorder %s32, 1
        %s507 = scalar_select %p506, %s32, 1
        %s508 = scalar_lea.vmem %s2, %s507
        %p509 = pneg %p112
        %p510 = pneg %p109
        %p511 = scmp.lt.s32.totalorder %s32, 1
        %s512 = scalar_select %p511, %s32, 1
        %s513 = smul.addr %s512, 48
        %s514 = smul.addr %s513, 8
        %s515 = scalar_lea.vmem %s3, %s514
        %p516 = pneg %p138
        %p517 = pneg %p135
        %p518 = scmp.lt.s32.totalorder %s32, 1
        %s519 = scalar_select %p518, %s32, 1
        %s520 = smul.addr %s519, 4
        %s521 = smul.addr %s520, 8
        %s522 = scalar_lea.vmem %s4, %s521
        %p523 = pneg %p164
        %p524 = pneg %p161
        %p525 = scmp.lt.s32.totalorder %s32, 1
        %s526 = scalar_select %p525, %s32, 1
        %s527 = scalar_lea.vmem %s5, %s526
        %p528 = pneg %p190
        %p529 = pneg %p187
        %p530 = scmp.lt.s32.totalorder %s32, 1
        %s531 = scalar_select %p530, %s32, 1
        %s532 = scalar_lea.vmem %s6, %s531
        %p533 = pneg %p216
        %p534 = pneg %p213
        %p535 = scmp.lt.s32.totalorder %s32, 1
        %s536 = scalar_select %p535, %s32, 1
        %s537 = smul.addr %s536, 4
        %s538 = smul.addr %s537, 8
        %s539 = scalar_lea.vmem %s7, %s538
        %p540 = pneg %p242
        %p541 = pneg %p239
        %p542 = scmp.lt.s32.totalorder %s32, 1
        %s543 = scalar_select %p542, %s32, 1
        %s544 = scalar_lea.vmem %s8, %s543
        %p545 = pneg %p268
        %p546 = pneg %p265
        %p547 = scmp.lt.s32.totalorder %s32, 1
        %s548 = scalar_select %p547, %s32, 1
        %s549 = smul.addr %s548, 16
        %s550 = smul.addr %s549, 8
        %s551 = scalar_lea.vmem %s9, %s550
        %p552 = pneg %p294
        %p553 = pneg %p291
        %p554 = scmp.lt.s32.totalorder %s32, 1
        %s555 = scalar_select %p554, %s32, 1
        %s556 = scalar_lea.vmem %s10, %s555
        %p557 = pneg %p320
        %p558 = pneg %p317
        %p559 = pneg %p341
        %p560 = pneg %p338
        %p561 = pneg %p362
        %p562 = pneg %p359
        %p563 = pneg %p388
        %p564 = pneg %p385
        %s565 = sand.u32 %s375, 1
        %s566 = scalar_lea.sflag [#allocation3], %s565
        %s567 = sand.u32 %s375, 1
        %s568 = smul.addr %s567, 8
        %s569 = scalar_lea.vmem [#allocation2], %s568
        %p570 = scmp.lt.s32.totalorder %s31, 1
        %s571 = scalar_select %p570, %s31, 1
        %s572 = smul.addr %s571, 8
        %s573 = scalar_lea.vmem %s0, %s572
        %p574 = scmp.lt.s32.totalorder %s32, 1
        %s575 = scalar_select %p574, %s32, 1
        %s576 = scalar_lea.vmem %s1, %s575
        %p577 = scmp.lt.s32.totalorder %s32, 1
        %s578 = scalar_select %p577, %s32, 1
        %s579 = scalar_lea.vmem %s2, %s578
        %p580 = scmp.lt.s32.totalorder %s32, 1
        %s581 = scalar_select %p580, %s32, 1
        %s582 = smul.addr %s581, 48
        %s583 = smul.addr %s582, 8
        %s584 = scalar_lea.vmem %s3, %s583
        %p585 = scmp.lt.s32.totalorder %s32, 1
        %s586 = scalar_select %p585, %s32, 1
        %s587 = smul.addr %s586, 4
        %s588 = smul.addr %s587, 8
        %s589 = scalar_lea.vmem %s4, %s588
        %p590 = scmp.lt.s32.totalorder %s32, 1
        %s591 = scalar_select %p590, %s32, 1
        %s592 = scalar_lea.vmem %s5, %s591
        %p593 = scmp.lt.s32.totalorder %s32, 1
        %s594 = scalar_select %p593, %s32, 1
        %s595 = scalar_lea.vmem %s6, %s594
        %p596 = scmp.lt.s32.totalorder %s32, 1
        %s597 = scalar_select %p596, %s32, 1
        %s598 = smul.addr %s597, 4
        %s599 = smul.addr %s598, 8
        %s600 = scalar_lea.vmem %s7, %s599
        %p601 = scmp.lt.s32.totalorder %s32, 1
        %s602 = scalar_select %p601, %s32, 1
        %s603 = scalar_lea.vmem %s8, %s602
        %p604 = scmp.lt.s32.totalorder %s32, 1
        %s605 = scalar_select %p604, %s32, 1
        %s606 = smul.addr %s605, 16
        %s607 = smul.addr %s606, 8
        %s608 = scalar_lea.vmem %s9, %s607
        %p609 = scmp.lt.s32.totalorder %s32, 1
        %s610 = scalar_select %p609, %s32, 1
        %s611 = scalar_lea.vmem %s10, %s610
        %p612 = scmp.eq.s32.totalorder %s32, 0
        // Predicated region
        $region73: #{tpu_custom_call.1} parent=71 // pred_check
          %p613 = pneg %p612
        $region74: #{tpu_custom_call.1} parent=71 // pred_check_branch
          %615 = sbr.rel (%p613) target = $region76
        $region75: #{tpu_custom_call.1} parent=71 // pred_region
          %v616 = vld [vmem:[%s573] sm:$0xff]
          %vm617 = vcmask 261120
          %618 = vst.msk [vmem:[%s569] sm:$0xff] %vm617, %v616
        $region76: #{tpu_custom_call.1} parent=71 // pred_fallthru
          _
        %v619 = vld [vmem:[%s569] sm:$0xff]
        %v620 = vld [vmem:[%s576] sm:$0x1]
        %v621 = vld [vmem:[%s579] sm:$0x1]
        %vm622 = vcmask 261120
        %v623 = vsel %vm622, %v619, 0.0
        %624 = vadd.xlane.f32.xlu0 %v623
        %v625 = vpop.xlane.xlu0 %624
        %v626 = vrcp.pop 32.0
        %v627 = vmul.f32 32.0, %v626
        %v628 = vsub.f32 1.0, %v627
        %v629 = vmul.f32 %v626, %v628
        %v630 = vadd.f32 %v626, %v629
        %vm631 = vweird.f32 %v626
        %v632 = vsel %vm631, %v626, %v630
        %v633 = vmul.f32 %v625, %v632
        %v634 = vsub.f32 %v619, %v633
        %v635 = vmul.f32 %v634, %v634
        %v636 = vsel %vm622, %v635, 0.0
        %637 = vadd.xlane.f32.xlu0 %v636
        %v638 = vpop.xlane.xlu0 %637
        %v639 = vmul.f32 %v638, %v632
        %v640 = vadd.f32 %v639, 1e-05
        %v641 = vrsqrt.pop %v640
        %v642 = vmul.f32 %v641, %v640
        %v643 = vmul.f32 %v642, %v641
        %v644 = vmul.f32 0.5, %v643
        %v645 = vsub.f32 1.5, %v644
        %v646 = vmul.f32 %v641, %v645
        %vm647 = vweird.f32 %v640
        %vm648 = vweird.f32 %v641
        %vm649 = vmor %vm647, %vm648
        %v650 = vsel %vm649, %v641, %v646
        %v651 = vmul.f32 %v634, %v650
        %v653 = vperm.slane %v620, 0
        %v655 = vmul.f32 %v651, %v653
        %v657 = vperm.slane %v621, 0
        %v659 = vadd.f32 %v655, %v657
        %v660 = vld [vmem:[%s584] sm:$0xff]
        %v661 = vld [vmem:[%s584 + $0x8] sm:$0xff]
        %v662 = vld [vmem:[%s584 + $0x10] sm:$0xff]
        %v663 = vld [vmem:[%s584 + $0x18] sm:$0xff]
        %v664 = vld [vmem:[%s584 + $0x20] sm:$0xff]
        %v665 = vld [vmem:[%s584 + $0x28] sm:$0xff]
        %v666 = vld [vmem:[%s584 + $0x30] sm:$0xff]
        %v667 = vld [vmem:[%s584 + $0x38] sm:$0xff]
        %v668 = vld [vmem:[%s584 + $0x40] sm:$0xff]
        %v669 = vld [vmem:[%s584 + $0x48] sm:$0xff]
        %v670 = vld [vmem:[%s584 + $0x50] sm:$0xff]
        %v671 = vld [vmem:[%s584 + $0x58] sm:$0xff]
        %v672 = vld [vmem:[%s584 + $0x60] sm:$0xff]
        %v673 = vld [vmem:[%s584 + $0x68] sm:$0xff]
        %v674 = vld [vmem:[%s584 + $0x70] sm:$0xff]
        %v675 = vld [vmem:[%s584 + $0x78] sm:$0xff]
        %v676 = vld [vmem:[%s584 + $0x80] sm:$0xff]
        %v677 = vld [vmem:[%s584 + $0x88] sm:$0xff]
        %v678 = vld [vmem:[%s584 + $0x90] sm:$0xff]
        %v679 = vld [vmem:[%s584 + $0x98] sm:$0xff]
        %v680 = vld [vmem:[%s584 + $0xa0] sm:$0xff]
        %v681 = vld [vmem:[%s584 + $0xa8] sm:$0xff]
        %v682 = vld [vmem:[%s584 + $0xb0] sm:$0xff]
        %v683 = vld [vmem:[%s584 + $0xb8] sm:$0xff]
        %v684 = vld [vmem:[%s584 + $0xc0] sm:$0xff]
        %v685 = vld [vmem:[%s584 + $0xc8] sm:$0xff]
        %v686 = vld [vmem:[%s584 + $0xd0] sm:$0xff]
        %v687 = vld [vmem:[%s584 + $0xd8] sm:$0xff]
        %v688 = vld [vmem:[%s584 + $0xe0] sm:$0xff]
        %v689 = vld [vmem:[%s584 + $0xe8] sm:$0xff]
        %v690 = vld [vmem:[%s584 + $0xf0] sm:$0xff]
        %v691 = vld [vmem:[%s584 + $0xf8] sm:$0xff]
        %v692 = vld [vmem:[%s584 + $0x100] sm:$0xff]
        %v693 = vld [vmem:[%s584 + $0x108] sm:$0xff]
        %v694 = vld [vmem:[%s584 + $0x110] sm:$0xff]
        %v695 = vld [vmem:[%s584 + $0x118] sm:$0xff]
        %v696 = vld [vmem:[%s584 + $0x120] sm:$0xff]
        %v697 = vld [vmem:[%s584 + $0x128] sm:$0xff]
        %v698 = vld [vmem:[%s584 + $0x130] sm:$0xff]
        %v699 = vld [vmem:[%s584 + $0x138] sm:$0xff]
        %v700 = vld [vmem:[%s584 + $0x140] sm:$0xff]
        %v701 = vld [vmem:[%s584 + $0x148] sm:$0xff]
        %v702 = vld [vmem:[%s584 + $0x150] sm:$0xff]
        %v703 = vld [vmem:[%s584 + $0x158] sm:$0xff]
        %v704 = vld [vmem:[%s584 + $0x160] sm:$0xff]
        %v705 = vld [vmem:[%s584 + $0x168] sm:$0xff]
        %v706 = vld [vmem:[%s584 + $0x170] sm:$0xff]
        %v707 = vld [vmem:[%s584 + $0x178] sm:$0xff]
        %v709 = vsel %vm622, %v659, 0
        %711 = vmatpush.msra.mxu0 0.0
        %712 = vmatpush.msra.mxu0 0.0
        %713 = vmatpush.msra.mxu0 0.0
        %714 = vmatpush.msra.mxu0 0.0
        %715 = vmatpush.msra.mxu0 0.0
        %716 = vmatpush.msra.mxu0 0.0
        %717 = vmatpush.msra.mxu0 0.0
        %718 = vmatpush.msra.mxu0 0.0
        %719 = vmatpush.msra.mxu0 0.0
        %720 = vmatpush.msra.mxu0 0.0
        %721 = vmatpush.msra.mxu0 0.0
        %722 = vmatpush.msra.mxu0 0.0
        %723 = vmatpush.msra.mxu0 %v663
        %724 = vmatpush.msra.mxu0 %v662
        %725 = vmatpush.msra.mxu0 %v661
        %726 = vmatpush.msra.mxu0 %v660
        %727 = vmatmul.f32.gmra.mxu0 %v709
        %v728 = vpop.f32.mrf.mxu0
        %v729 = vadd.f32 0.0, %v728
        %730 = vdwg.mxu0
        %731 = vmatpush.msra.mxu0 0.0
        %732 = vmatpush.msra.mxu0 0.0
        %733 = vmatpush.msra.mxu0 0.0
        %734 = vmatpush.msra.mxu0 0.0
        %735 = vmatpush.msra.mxu0 0.0
        %736 = vmatpush.msra.mxu0 0.0
        %737 = vmatpush.msra.mxu0 0.0
        %738 = vmatpush.msra.mxu0 0.0
        %739 = vmatpush.msra.mxu0 0.0
        %740 = vmatpush.msra.mxu0 0.0
        %741 = vmatpush.msra.mxu0 0.0
        %742 = vmatpush.msra.mxu0 0.0
        %743 = vmatpush.msra.mxu0 %v667
        %744 = vmatpush.msra.mxu0 %v666
        %745 = vmatpush.msra.mxu0 %v665
        %746 = vmatpush.msra.mxu0 %v664
        %747 = vmatmul.f32.gmra.mxu0 %v709
        %v748 = vpop.f32.mrf.mxu0
        %v749 = vadd.f32 0.0, %v748
        %750 = vdwg.mxu0
        %751 = vmatpush.msra.mxu0 0.0
        %752 = vmatpush.msra.mxu0 0.0
        %753 = vmatpush.msra.mxu0 0.0
        %754 = vmatpush.msra.mxu0 0.0
        %755 = vmatpush.msra.mxu0 0.0
        %756 = vmatpush.msra.mxu0 0.0
        %757 = vmatpush.msra.mxu0 0.0
        %758 = vmatpush.msra.mxu0 0.0
        %759 = vmatpush.msra.mxu0 0.0
        %760 = vmatpush.msra.mxu0 0.0
        %761 = vmatpush.msra.mxu0 0.0
        %762 = vmatpush.msra.mxu0 0.0
        %763 = vmatpush.msra.mxu0 %v671
        %764 = vmatpush.msra.mxu0 %v670
        %765 = vmatpush.msra.mxu0 %v669
        %766 = vmatpush.msra.mxu0 %v668
        %767 = vmatmul.f32.gmra.mxu0 %v709
        %v768 = vpop.f32.mrf.mxu0
        %v769 = vadd.f32 0.0, %v768
        %770 = vdwg.mxu0
        %771 = vmatpush.msra.mxu0 0.0
        %772 = vmatpush.msra.mxu0 0.0
        %773 = vmatpush.msra.mxu0 0.0
        %774 = vmatpush.msra.mxu0 0.0
        %775 = vmatpush.msra.mxu0 0.0
        %776 = vmatpush.msra.mxu0 0.0
        %777 = vmatpush.msra.mxu0 0.0
        %778 = vmatpush.msra.mxu0 0.0
        %779 = vmatpush.msra.mxu0 0.0
        %780 = vmatpush.msra.mxu0 0.0
        %781 = vmatpush.msra.mxu0 0.0
        %782 = vmatpush.msra.mxu0 0.0
        %783 = vmatpush.msra.mxu0 %v675
        %784 = vmatpush.msra.mxu0 %v674
        %785 = vmatpush.msra.mxu0 %v673
        %786 = vmatpush.msra.mxu0 %v672
        %787 = vmatmul.f32.gmra.mxu0 %v709
        %v788 = vpop.f32.mrf.mxu0
        %v789 = vadd.f32 0.0, %v788
        %790 = vdwg.mxu0
        %791 = vmatpush.msra.mxu0 0.0
        %792 = vmatpush.msra.mxu0 0.0
        %793 = vmatpush.msra.mxu0 0.0
        %794 = vmatpush.msra.mxu0 0.0
        %795 = vmatpush.msra.mxu0 0.0
        %796 = vmatpush.msra.mxu0 0.0
        %797 = vmatpush.msra.mxu0 0.0
        %798 = vmatpush.msra.mxu0 0.0
        %799 = vmatpush.msra.mxu0 0.0
        %800 = vmatpush.msra.mxu0 0.0
        %801 = vmatpush.msra.mxu0 0.0
        %802 = vmatpush.msra.mxu0 0.0
        %803 = vmatpush.msra.mxu0 %v679
        %804 = vmatpush.msra.mxu0 %v678
        %805 = vmatpush.msra.mxu0 %v677
        %806 = vmatpush.msra.mxu0 %v676
        %807 = vmatmul.f32.gmra.mxu0 %v709
        %v808 = vpop.f32.mrf.mxu0
        %v809 = vadd.f32 0.0, %v808
        %810 = vdwg.mxu0
        %811 = vmatpush.msra.mxu0 0.0
        %812 = vmatpush.msra.mxu0 0.0
        %813 = vmatpush.msra.mxu0 0.0
        %814 = vmatpush.msra.mxu0 0.0
        %815 = vmatpush.msra.mxu0 0.0
        %816 = vmatpush.msra.mxu0 0.0
        %817 = vmatpush.msra.mxu0 0.0
        %818 = vmatpush.msra.mxu0 0.0
        %819 = vmatpush.msra.mxu0 0.0
        %820 = vmatpush.msra.mxu0 0.0
        %821 = vmatpush.msra.mxu0 0.0
        %822 = vmatpush.msra.mxu0 0.0
        %823 = vmatpush.msra.mxu0 %v683
        %824 = vmatpush.msra.mxu0 %v682
        %825 = vmatpush.msra.mxu0 %v681
        %826 = vmatpush.msra.mxu0 %v680
        %827 = vmatmul.f32.gmra.mxu0 %v709
        %v828 = vpop.f32.mrf.mxu0
        %v829 = vadd.f32 0.0, %v828
        %830 = vdwg.mxu0
        %831 = vmatpush.msra.mxu0 0.0
        %832 = vmatpush.msra.mxu0 0.0
        %833 = vmatpush.msra.mxu0 0.0
        %834 = vmatpush.msra.mxu0 0.0
        %835 = vmatpush.msra.mxu0 0.0
        %836 = vmatpush.msra.mxu0 0.0
        %837 = vmatpush.msra.mxu0 0.0
        %838 = vmatpush.msra.mxu0 0.0
        %839 = vmatpush.msra.mxu0 0.0
        %840 = vmatpush.msra.mxu0 0.0
        %841 = vmatpush.msra.mxu0 0.0
        %842 = vmatpush.msra.mxu0 0.0
        %843 = vmatpush.msra.mxu0 %v687
        %844 = vmatpush.msra.mxu0 %v686
        %845 = vmatpush.msra.mxu0 %v685
        %846 = vmatpush.msra.mxu0 %v684
        %847 = vmatmul.f32.gmra.mxu0 %v709
        %v848 = vpop.f32.mrf.mxu0
        %v849 = vadd.f32 0.0, %v848
        %850 = vdwg.mxu0
        %851 = vmatpush.msra.mxu0 0.0
        %852 = vmatpush.msra.mxu0 0.0
        %853 = vmatpush.msra.mxu0 0.0
        %854 = vmatpush.msra.mxu0 0.0
        %855 = vmatpush.msra.mxu0 0.0
        %856 = vmatpush.msra.mxu0 0.0
        %857 = vmatpush.msra.mxu0 0.0
        %858 = vmatpush.msra.mxu0 0.0
        %859 = vmatpush.msra.mxu0 0.0
        %860 = vmatpush.msra.mxu0 0.0
        %861 = vmatpush.msra.mxu0 0.0
        %862 = vmatpush.msra.mxu0 0.0
        %863 = vmatpush.msra.mxu0 %v691
        %864 = vmatpush.msra.mxu0 %v690
        %865 = vmatpush.msra.mxu0 %v689
        %866 = vmatpush.msra.mxu0 %v688
        %867 = vmatmul.f32.gmra.mxu0 %v709
        %v868 = vpop.f32.mrf.mxu0
        %v869 = vadd.f32 0.0, %v868
        %870 = vdwg.mxu0
        %871 = vmatpush.msra.mxu0 0.0
        %872 = vmatpush.msra.mxu0 0.0
        %873 = vmatpush.msra.mxu0 0.0
        %874 = vmatpush.msra.mxu0 0.0
        %875 = vmatpush.msra.mxu0 0.0
        %876 = vmatpush.msra.mxu0 0.0
        %877 = vmatpush.msra.mxu0 0.0
        %878 = vmatpush.msra.mxu0 0.0
        %879 = vmatpush.msra.mxu0 0.0
        %880 = vmatpush.msra.mxu0 0.0
        %881 = vmatpush.msra.mxu0 0.0
        %882 = vmatpush.msra.mxu0 0.0
        %883 = vmatpush.msra.mxu0 %v695
        %884 = vmatpush.msra.mxu0 %v694
        %885 = vmatpush.msra.mxu0 %v693
        %886 = vmatpush.msra.mxu0 %v692
        %887 = vmatmul.f32.gmra.mxu0 %v709
        %v888 = vpop.f32.mrf.mxu0
        %v889 = vadd.f32 0.0, %v888
        %890 = vdwg.mxu0
        %891 = vmatpush.msra.mxu0 0.0
        %892 = vmatpush.msra.mxu0 0.0
        %893 = vmatpush.msra.mxu0 0.0
        %894 = vmatpush.msra.mxu0 0.0
        %895 = vmatpush.msra.mxu0 0.0
        %896 = vmatpush.msra.mxu0 0.0
        %897 = vmatpush.msra.mxu0 0.0
        %898 = vmatpush.msra.mxu0 0.0
        %899 = vmatpush.msra.mxu0 0.0
        %900 = vmatpush.msra.mxu0 0.0
        %901 = vmatpush.msra.mxu0 0.0
        %902 = vmatpush.msra.mxu0 0.0
        %903 = vmatpush.msra.mxu0 %v699
        %904 = vmatpush.msra.mxu0 %v698
        %905 = vmatpush.msra.mxu0 %v697
        %906 = vmatpush.msra.mxu0 %v696
        %907 = vmatmul.f32.gmra.mxu0 %v709
        %v908 = vpop.f32.mrf.mxu0
        %v909 = vadd.f32 0.0, %v908
        %910 = vdwg.mxu0
        %911 = vmatpush.msra.mxu0 0.0
        %912 = vmatpush.msra.mxu0 0.0
        %913 = vmatpush.msra.mxu0 0.0
        %914 = vmatpush.msra.mxu0 0.0
        %915 = vmatpush.msra.mxu0 0.0
        %916 = vmatpush.msra.mxu0 0.0
        %917 = vmatpush.msra.mxu0 0.0
        %918 = vmatpush.msra.mxu0 0.0
        %919 = vmatpush.msra.mxu0 0.0
        %920 = vmatpush.msra.mxu0 0.0
        %921 = vmatpush.msra.mxu0 0.0
        %922 = vmatpush.msra.mxu0 0.0
        %923 = vmatpush.msra.mxu0 %v703
        %924 = vmatpush.msra.mxu0 %v702
        %925 = vmatpush.msra.mxu0 %v701
        %926 = vmatpush.msra.mxu0 %v700
        %927 = vmatmul.f32.gmra.mxu0 %v709
        %v928 = vpop.f32.mrf.mxu0
        %v929 = vadd.f32 0.0, %v928
        %930 = vdwg.mxu0
        %931 = vmatpush.msra.mxu0 0.0
        %932 = vmatpush.msra.mxu0 0.0
        %933 = vmatpush.msra.mxu0 0.0
        %934 = vmatpush.msra.mxu0 0.0
        %935 = vmatpush.msra.mxu0 0.0
        %936 = vmatpush.msra.mxu0 0.0
        %937 = vmatpush.msra.mxu0 0.0
        %938 = vmatpush.msra.mxu0 0.0
        %939 = vmatpush.msra.mxu0 0.0
        %940 = vmatpush.msra.mxu0 0.0
        %941 = vmatpush.msra.mxu0 0.0
        %942 = vmatpush.msra.mxu0 0.0
        %943 = vmatpush.msra.mxu0 %v707
        %944 = vmatpush.msra.mxu0 %v706
        %945 = vmatpush.msra.mxu0 %v705
        %946 = vmatpush.msra.mxu0 %v704
        %947 = vmatmul.f32.gmra.mxu0 %v709
        %v948 = vpop.f32.mrf.mxu0
        %v949 = vadd.f32 0.0, %v948
        %950 = vdwg.mxu0
        %vm951 = vcmask 64512
        %v953 = vsel %vm951, %v729, 0
        %v956 = vsel %vm951, %v809, 0
        %958 = vmatpush.xpose.msra.mxu0 0.0
        %959 = vmatpush.xpose.msra.mxu0 0.0
        %960 = vmatpush.xpose.msra.mxu0 0.0
        %961 = vmatpush.xpose.msra.mxu0 0.0
        %962 = vmatpush.xpose.msra.mxu0 0.0
        %963 = vmatpush.xpose.msra.mxu0 0.0
        %964 = vmatpush.xpose.msra.mxu0 0.0
        %965 = vmatpush.xpose.msra.mxu0 0.0
        %966 = vmatpush.xpose.msra.mxu0 0.0
        %967 = vmatpush.xpose.msra.mxu0 0.0
        %968 = vmatpush.xpose.msra.mxu0 0.0
        %969 = vmatpush.xpose.msra.mxu0 0.0
        %970 = vmatpush.xpose.msra.mxu0 0.0
        %971 = vmatpush.xpose.msra.mxu0 0.0
        %972 = vmatpush.xpose.msra.mxu0 0.0
        %973 = vmatpush.xpose.msra.mxu0 %v956
        %974 = vmatmul.f32.gmra.mxu0 %v953
        %v975 = vpop.f32.mrf.mxu0
        %v976 = vadd.f32 0.0, %v975
        %977 = vdwg.mxu0
        %v979 = vsel %vm951, %v749, 0
        %v982 = vsel %vm951, %v829, 0
        %984 = vmatpush.xpose.msra.mxu0 0.0
        %985 = vmatpush.xpose.msra.mxu0 0.0
        %986 = vmatpush.xpose.msra.mxu0 0.0
        %987 = vmatpush.xpose.msra.mxu0 0.0
        %988 = vmatpush.xpose.msra.mxu0 0.0
        %989 = vmatpush.xpose.msra.mxu0 0.0
        %990 = vmatpush.xpose.msra.mxu0 0.0
        %991 = vmatpush.xpose.msra.mxu0 0.0
        %992 = vmatpush.xpose.msra.mxu0 0.0
        %993 = vmatpush.xpose.msra.mxu0 0.0
        %994 = vmatpush.xpose.msra.mxu0 0.0
        %995 = vmatpush.xpose.msra.mxu0 0.0
        %996 = vmatpush.xpose.msra.mxu0 0.0
        %997 = vmatpush.xpose.msra.mxu0 0.0
        %998 = vmatpush.xpose.msra.mxu0 0.0
        %999 = vmatpush.xpose.msra.mxu0 %v982
        %1000 = vmatmul.f32.gmra.mxu0 %v979
        %v1001 = vpop.f32.mrf.mxu0
        %v1002 = vadd.f32 0.0, %v1001
        %1003 = vdwg.mxu0
        %v1005 = vsel %vm951, %v769, 0
        %v1008 = vsel %vm951, %v849, 0
        %1010 = vmatpush.xpose.msra.mxu0 0.0
        %1011 = vmatpush.xpose.msra.mxu0 0.0
        %1012 = vmatpush.xpose.msra.mxu0 0.0
        %1013 = vmatpush.xpose.msra.mxu0 0.0
        %1014 = vmatpush.xpose.msra.mxu0 0.0
        %1015 = vmatpush.xpose.msra.mxu0 0.0
        %1016 = vmatpush.xpose.msra.mxu0 0.0
        %1017 = vmatpush.xpose.msra.mxu0 0.0
        %1018 = vmatpush.xpose.msra.mxu0 0.0
        %1019 = vmatpush.xpose.msra.mxu0 0.0
        %1020 = vmatpush.xpose.msra.mxu0 0.0
        %1021 = vmatpush.xpose.msra.mxu0 0.0
        %1022 = vmatpush.xpose.msra.mxu0 0.0
        %1023 = vmatpush.xpose.msra.mxu0 0.0
        %1024 = vmatpush.xpose.msra.mxu0 0.0
        %1025 = vmatpush.xpose.msra.mxu0 %v1008
        %1026 = vmatmul.f32.gmra.mxu0 %v1005
        %v1027 = vpop.f32.mrf.mxu0
        %v1028 = vadd.f32 0.0, %v1027
        %1029 = vdwg.mxu0
        %v1031 = vsel %vm951, %v789, 0
        %v1034 = vsel %vm951, %v869, 0
        %1036 = vmatpush.xpose.msra.mxu0 0.0
        %1037 = vmatpush.xpose.msra.mxu0 0.0
        %1038 = vmatpush.xpose.msra.mxu0 0.0
        %1039 = vmatpush.xpose.msra.mxu0 0.0
        %1040 = vmatpush.xpose.msra.mxu0 0.0
        %1041 = vmatpush.xpose.msra.mxu0 0.0
        %1042 = vmatpush.xpose.msra.mxu0 0.0
        %1043 = vmatpush.xpose.msra.mxu0 0.0
        %1044 = vmatpush.xpose.msra.mxu0 0.0
        %1045 = vmatpush.xpose.msra.mxu0 0.0
        %1046 = vmatpush.xpose.msra.mxu0 0.0
        %1047 = vmatpush.xpose.msra.mxu0 0.0
        %1048 = vmatpush.xpose.msra.mxu0 0.0
        %1049 = vmatpush.xpose.msra.mxu0 0.0
        %1050 = vmatpush.xpose.msra.mxu0 0.0
        %1051 = vmatpush.xpose.msra.mxu0 %v1034
        %1052 = vmatmul.f32.gmra.mxu0 %v1031
        %v1053 = vpop.f32.mrf.mxu0
        %v1054 = vadd.f32 0.0, %v1053
        %1055 = vdwg.mxu0
        %v1056 = vmul.f32 %v976, 0.35355338
        %v1057 = vmul.f32 %v1002, 0.35355338
        %v1058 = vmul.f32 %v1028, 0.35355338
        %v1059 = vmul.f32 %v1054, 0.35355338
        %v1060 = vsel %vm951, %v1056, -inf
        %1061 = vmax.xlane.f32.xlu0 %v1060
        %v1062 = vpop.xlane.xlu0 %1061
        %v1063 = vsel %vm951, %v1057, -inf
        %1064 = vmax.xlane.f32.xlu0 %v1063
        %v1065 = vpop.xlane.xlu0 %1064
        %v1066 = vsel %vm951, %v1058, -inf
        %1067 = vmax.xlane.f32.xlu0 %v1066
        %v1068 = vpop.xlane.xlu0 %1067
        %v1069 = vsel %vm951, %v1059, -inf
        %1070 = vmax.xlane.f32.xlu0 %v1069
        %v1071 = vpop.xlane.xlu0 %1070
        %v1072 = vsub.f32 %v1056, %v1062
        %v1073 = vsub.f32 %v1057, %v1065
        %v1074 = vsub.f32 %v1058, %v1068
        %v1075 = vsub.f32 %v1059, %v1071
        %v1076 = vmul.f32 %v1072, 1.442695
        %v1077 = vpow.pop %v1076
        %v1078 = vmul.f32 %v1073, 1.442695
        %v1079 = vpow.pop %v1078
        %v1080 = vmul.f32 %v1074, 1.442695
        %v1081 = vpow.pop %v1080
        %v1082 = vmul.f32 %v1075, 1.442695
        %v1083 = vpow.pop %v1082
        %v1084 = vsel %vm951, %v1077, 0.0
        %1085 = vadd.xlane.f32.xlu0 %v1084
        %v1086 = vpop.xlane.xlu0 %1085
        %v1087 = vsel %vm951, %v1079, 0.0
        %1088 = vadd.xlane.f32.xlu0 %v1087
        %v1089 = vpop.xlane.xlu0 %1088
        %v1090 = vsel %vm951, %v1081, 0.0
        %1091 = vadd.xlane.f32.xlu0 %v1090
        %v1092 = vpop.xlane.xlu0 %1091
        %v1093 = vsel %vm951, %v1083, 0.0
        %1094 = vadd.xlane.f32.xlu0 %v1093
        %v1095 = vpop.xlane.xlu0 %1094
        %v1096 = vrcp.pop %v1086
        %v1097 = vrcp.pop %v1089
        %v1098 = vrcp.pop %v1092
        %v1099 = vrcp.pop %v1095
        %v1100 = vmul.f32 %v1077, %v1096
        %v1101 = vmul.f32 %v1079, %v1097
        %v1102 = vmul.f32 %v1081, %v1098
        %v1103 = vmul.f32 %v1083, %v1099
        %v1105 = vsel %vm951, %v1100, 0
        %1107 = vmatpush.msra.mxu0 0.0
        %1108 = vmatpush.msra.mxu0 0.0
        %1109 = vmatpush.msra.mxu0 0.0
        %1110 = vmatpush.msra.mxu0 0.0
        %1111 = vmatpush.msra.mxu0 0.0
        %1112 = vmatpush.msra.mxu0 0.0
        %1113 = vmatpush.msra.mxu0 0.0
        %1114 = vmatpush.msra.mxu0 0.0
        %1115 = vmatpush.msra.mxu0 0.0
        %1116 = vmatpush.msra.mxu0 0.0
        %1117 = vmatpush.msra.mxu0 0.0
        %1118 = vmatpush.msra.mxu0 0.0
        %1119 = vmatpush.msra.mxu0 0.0
        %1120 = vmatpush.msra.mxu0 0.0
        %1121 = vmatpush.msra.mxu0 0.0
        %1122 = vmatpush.msra.mxu0 %v889
        %1123 = vmatmul.f32.gmra.mxu0 %v1105
        %v1124 = vpop.f32.mrf.mxu0
        %v1125 = vadd.f32 0.0, %v1124
        %1126 = vdwg.mxu0
        %v1128 = vsel %vm951, %v1101, 0
        %1130 = vmatpush.msra.mxu0 0.0
        %1131 = vmatpush.msra.mxu0 0.0
        %1132 = vmatpush.msra.mxu0 0.0
        %1133 = vmatpush.msra.mxu0 0.0
        %1134 = vmatpush.msra.mxu0 0.0
        %1135 = vmatpush.msra.mxu0 0.0
        %1136 = vmatpush.msra.mxu0 0.0
        %1137 = vmatpush.msra.mxu0 0.0
        %1138 = vmatpush.msra.mxu0 0.0
        %1139 = vmatpush.msra.mxu0 0.0
        %1140 = vmatpush.msra.mxu0 0.0
        %1141 = vmatpush.msra.mxu0 0.0
        %1142 = vmatpush.msra.mxu0 0.0
        %1143 = vmatpush.msra.mxu0 0.0
        %1144 = vmatpush.msra.mxu0 0.0
        %1145 = vmatpush.msra.mxu0 %v909
        %1146 = vmatmul.f32.gmra.mxu0 %v1128
        %v1147 = vpop.f32.mrf.mxu0
        %v1148 = vadd.f32 0.0, %v1147
        %1149 = vdwg.mxu0
        %v1151 = vsel %vm951, %v1102, 0
        %1153 = vmatpush.msra.mxu0 0.0
        %1154 = vmatpush.msra.mxu0 0.0
        %1155 = vmatpush.msra.mxu0 0.0
        %1156 = vmatpush.msra.mxu0 0.0
        %1157 = vmatpush.msra.mxu0 0.0
        %1158 = vmatpush.msra.mxu0 0.0
        %1159 = vmatpush.msra.mxu0 0.0
        %1160 = vmatpush.msra.mxu0 0.0
        %1161 = vmatpush.msra.mxu0 0.0
        %1162 = vmatpush.msra.mxu0 0.0
        %1163 = vmatpush.msra.mxu0 0.0
        %1164 = vmatpush.msra.mxu0 0.0
        %1165 = vmatpush.msra.mxu0 0.0
        %1166 = vmatpush.msra.mxu0 0.0
        %1167 = vmatpush.msra.mxu0 0.0
        %1168 = vmatpush.msra.mxu0 %v929
        %1169 = vmatmul.f32.gmra.mxu0 %v1151
        %v1170 = vpop.f32.mrf.mxu0
        %v1171 = vadd.f32 0.0, %v1170
        %1172 = vdwg.mxu0
        %v1174 = vsel %vm951, %v1103, 0
        %1176 = vmatpush.msra.mxu0 0.0
        %1177 = vmatpush.msra.mxu0 0.0
        %1178 = vmatpush.msra.mxu0 0.0
        %1179 = vmatpush.msra.mxu0 0.0
        %1180 = vmatpush.msra.mxu0 0.0
        %1181 = vmatpush.msra.mxu0 0.0
        %1182 = vmatpush.msra.mxu0 0.0
        %1183 = vmatpush.msra.mxu0 0.0
        %1184 = vmatpush.msra.mxu0 0.0
        %1185 = vmatpush.msra.mxu0 0.0
        %1186 = vmatpush.msra.mxu0 0.0
        %1187 = vmatpush.msra.mxu0 0.0
        %1188 = vmatpush.msra.mxu0 0.0
        %1189 = vmatpush.msra.mxu0 0.0
        %1190 = vmatpush.msra.mxu0 0.0
        %1191 = vmatpush.msra.mxu0 %v949
        %1192 = vmatmul.f32.gmra.mxu0 %v1174
        %v1193 = vpop.f32.mrf.mxu0
        %v1194 = vadd.f32 0.0, %v1193
        %1195 = vdwg.mxu0
        %v1196 = vld [vmem:[%s589] sm:$0xff]
        %v1197 = vld [vmem:[%s589 + $0x8] sm:$0xff]
        %v1198 = vld [vmem:[%s589 + $0x10] sm:$0xff]
        %v1199 = vld [vmem:[%s589 + $0x18] sm:$0xff]
        %v1201 = vsel %vm951, %v1125, 0
        %1203 = vmatpush.msra.mxu0 0.0
        %1204 = vmatpush.msra.mxu0 0.0
        %1205 = vmatpush.msra.mxu0 0.0
        %1206 = vmatpush.msra.mxu0 0.0
        %1207 = vmatpush.msra.mxu0 0.0
        %1208 = vmatpush.msra.mxu0 0.0
        %1209 = vmatpush.msra.mxu0 0.0
        %1210 = vmatpush.msra.mxu0 0.0
        %1211 = vmatpush.msra.mxu0 0.0
        %1212 = vmatpush.msra.mxu0 0.0
        %1213 = vmatpush.msra.mxu0 0.0
        %1214 = vmatpush.msra.mxu0 0.0
        %1215 = vmatpush.msra.mxu0 0.0
        %1216 = vmatpush.msra.mxu0 0.0
        %1217 = vmatpush.msra.mxu0 0.0
        %1218 = vmatpush.msra.mxu0 %v1196
        %1219 = vmatmul.f32.gmra.mxu0 %v1201
        %v1220 = vpop.f32.mrf.mxu0
        %v1221 = vadd.f32 0.0, %v1220
        %1222 = vdwg.mxu0
        %v1224 = vsel %vm951, %v1148, 0
        %1226 = vmatpush.msra.mxu0 0.0
        %1227 = vmatpush.msra.mxu0 0.0
        %1228 = vmatpush.msra.mxu0 0.0
        %1229 = vmatpush.msra.mxu0 0.0
        %1230 = vmatpush.msra.mxu0 0.0
        %1231 = vmatpush.msra.mxu0 0.0
        %1232 = vmatpush.msra.mxu0 0.0
        %1233 = vmatpush.msra.mxu0 0.0
        %1234 = vmatpush.msra.mxu0 0.0
        %1235 = vmatpush.msra.mxu0 0.0
        %1236 = vmatpush.msra.mxu0 0.0
        %1237 = vmatpush.msra.mxu0 0.0
        %1238 = vmatpush.msra.mxu0 0.0
        %1239 = vmatpush.msra.mxu0 0.0
        %1240 = vmatpush.msra.mxu0 0.0
        %1241 = vmatpush.msra.mxu0 %v1197
        %1242 = vmatmul.f32.gmra.mxu0 %v1224
        %v1243 = vpop.f32.mrf.mxu0
        %v1244 = vadd.f32 0.0, %v1243
        %1245 = vdwg.mxu0
        %v1247 = vsel %vm951, %v1171, 0
        %1249 = vmatpush.msra.mxu0 0.0
        %1250 = vmatpush.msra.mxu0 0.0
        %1251 = vmatpush.msra.mxu0 0.0
        %1252 = vmatpush.msra.mxu0 0.0
        %1253 = vmatpush.msra.mxu0 0.0
        %1254 = vmatpush.msra.mxu0 0.0
        %1255 = vmatpush.msra.mxu0 0.0
        %1256 = vmatpush.msra.mxu0 0.0
        %1257 = vmatpush.msra.mxu0 0.0
        %1258 = vmatpush.msra.mxu0 0.0
        %1259 = vmatpush.msra.mxu0 0.0
        %1260 = vmatpush.msra.mxu0 0.0
        %1261 = vmatpush.msra.mxu0 0.0
        %1262 = vmatpush.msra.mxu0 0.0
        %1263 = vmatpush.msra.mxu0 0.0
        %1264 = vmatpush.msra.mxu0 %v1198
        %1265 = vmatmul.f32.gmra.mxu0 %v1247
        %v1266 = vpop.f32.mrf.mxu0
        %v1267 = vadd.f32 0.0, %v1266
        %1268 = vdwg.mxu0
        %v1270 = vsel %vm951, %v1194, 0
        %1272 = vmatpush.msra.mxu0 0.0
        %1273 = vmatpush.msra.mxu0 0.0
        %1274 = vmatpush.msra.mxu0 0.0
        %1275 = vmatpush.msra.mxu0 0.0
        %1276 = vmatpush.msra.mxu0 0.0
        %1277 = vmatpush.msra.mxu0 0.0
        %1278 = vmatpush.msra.mxu0 0.0
        %1279 = vmatpush.msra.mxu0 0.0
        %1280 = vmatpush.msra.mxu0 0.0
        %1281 = vmatpush.msra.mxu0 0.0
        %1282 = vmatpush.msra.mxu0 0.0
        %1283 = vmatpush.msra.mxu0 0.0
        %1284 = vmatpush.msra.mxu0 0.0
        %1285 = vmatpush.msra.mxu0 0.0
        %1286 = vmatpush.msra.mxu0 0.0
        %1287 = vmatpush.msra.mxu0 %v1199
        %1288 = vmatmul.f32.gmra.mxu0 %v1270
        %v1289 = vpop.f32.mrf.mxu0
        %v1290 = vadd.f32 0.0, %v1289
        %1291 = vdwg.mxu0
        %v1292 = vadd.f32 %v1221, %v1244
        %v1293 = vadd.f32 %v1292, %v1267
        %v1294 = vadd.f32 %v1293, %v1290
        %v1295 = vadd.f32 %v619, %v1294
        %v1296 = vld [vmem:[%s592] sm:$0x1]
        %v1297 = vld [vmem:[%s595] sm:$0x1]
        %v1298 = vsel %vm622, %v1295, 0.0
        %1299 = vadd.xlane.f32.xlu0 %v1298
        %v1300 = vpop.xlane.xlu0 %1299
        %v1301 = vmul.f32 %v1300, %v632
        %v1302 = vsub.f32 %v1295, %v1301
        %v1303 = vmul.f32 %v1302, %v1302
        %v1304 = vsel %vm622, %v1303, 0.0
        %1305 = vadd.xlane.f32.xlu0 %v1304
        %v1306 = vpop.xlane.xlu0 %1305
        %v1307 = vmul.f32 %v1306, %v632
        %v1308 = vadd.f32 %v1307, 1e-05
        %v1309 = vrsqrt.pop %v1308
        %v1310 = vmul.f32 %v1309, %v1308
        %v1311 = vmul.f32 %v1310, %v1309
        %v1312 = vmul.f32 0.5, %v1311
        %v1313 = vsub.f32 1.5, %v1312
        %v1314 = vmul.f32 %v1309, %v1313
        %vm1315 = vweird.f32 %v1308
        %vm1316 = vweird.f32 %v1309
        %vm1317 = vmor %vm1315, %vm1316
        %v1318 = vsel %vm1317, %v1309, %v1314
        %v1319 = vmul.f32 %v1302, %v1318
        %v1321 = vperm.slane %v1296, 0
        %v1323 = vmul.f32 %v1319, %v1321
        %v1325 = vperm.slane %v1297, 0
        %v1327 = vadd.f32 %v1323, %v1325
        %v1328 = vld [vmem:[%s600] sm:$0xff]
        %v1329 = vld [vmem:[%s600 + $0x8] sm:$0xff]
        %v1330 = vld [vmem:[%s600 + $0x10] sm:$0xff]
        %v1331 = vld [vmem:[%s600 + $0x18] sm:$0xff]
        %v1332 = vld [vmem:[%s603] sm:$0x1]
        %v1334 = vperm.slane %v1332, 0
        %v1337 = vsel %vm622, %v1327, 0
        %1339 = vmatpush.msra.mxu0 0.0
        %1340 = vmatpush.msra.mxu0 0.0
        %1341 = vmatpush.msra.mxu0 0.0
        %1342 = vmatpush.msra.mxu0 0.0
        %1343 = vmatpush.msra.mxu0 0.0
        %1344 = vmatpush.msra.mxu0 0.0
        %1345 = vmatpush.msra.mxu0 0.0
        %1346 = vmatpush.msra.mxu0 0.0
        %1347 = vmatpush.msra.mxu0 0.0
        %1348 = vmatpush.msra.mxu0 0.0
        %1349 = vmatpush.msra.mxu0 0.0
        %1350 = vmatpush.msra.mxu0 0.0
        %1351 = vmatpush.msra.mxu0 %v1331
        %1352 = vmatpush.msra.mxu0 %v1330
        %1353 = vmatpush.msra.mxu0 %v1329
        %1354 = vmatpush.msra.mxu0 %v1328
        %1355 = vmatmul.f32.gmra.mxu0 %v1337
        %v1356 = vpop.f32.mrf.mxu0
        %v1357 = vadd.f32 %v1334, %v1356
        %1358 = vdwg.mxu0
        %v1359 = vmul.f32 %v1357, 0.5
        %v1360 = vmul.f32 %v1357, 0.70710677
        %v1361 = vmul.f32 %v1360, %v1360
        %v1362 = vmin.f32 16.0, %v1361
        %v1363 = vmul.f32 %v1362, 2.1237322e-06
        %v1364 = vadd.f32 %v1363, 0.00028619796
        %v1365 = vmul.f32 %v1362, %v1364
        %v1366 = vadd.f32 %v1365, 0.0036580483
        %v1367 = vmul.f32 %v1362, %v1366
        %v1368 = vadd.f32 %v1367, 0.05243302
        %v1369 = vmul.f32 %v1362, %v1368
        %v1370 = vadd.f32 %v1369, 0.18741608
        %v1371 = vmul.f32 %v1362, %v1370
        %v1372 = vadd.f32 %v1371, 1.1283791
        %v1373 = vmul.f32 %v1360, %v1372
        %v1374 = vmul.f32 %v1362, 3.8918573e-05
        %v1375 = vadd.f32 %v1374, 0.001143296
        %v1376 = vmul.f32 %v1362, %v1375
        %v1377 = vadd.f32 %v1376, 0.014752088
        %v1378 = vmul.f32 %v1362, %v1377
        %v1379 = vadd.f32 %v1378, 0.112945676
        %v1380 = vmul.f32 %v1362, %v1379
        %v1381 = vadd.f32 %v1380, 0.4994258
        %v1382 = vmul.f32 %v1362, %v1381
        %v1383 = vadd.f32 %v1382, 1.0
        %v1384 = vrcp.pop %v1383
        %v1385 = vmul.f32 %v1383, %v1384
        %v1386 = vsub.f32 1.0, %v1385
        %v1387 = vmul.f32 %v1384, %v1386
        %v1388 = vadd.f32 %v1384, %v1387
        %vm1389 = vweird.f32 %v1383
        %vm1390 = vweird.f32 %v1384
        %vm1391 = vmor %vm1389, %vm1390
        %v1392 = vsel %vm1391, %v1384, %v1388
        %v1393 = vand.u32 2147483647, %v1383
        %vm1394 = vcmp.eq.f32.partialorder %v1393, 8.507059e+37
        %v1395 = vand.u32 %v1383, 2147483648
        %v1396 = vor.u32 1.1754944e-38, %v1395
        %v1397 = vsel %vm1394, %v1396, %v1392
        %v1398 = vmul.f32 %v1373, %v1397
        %v1399 = vmin.f32 %v1398, 1.0
        %v1400 = vmax.f32 %v1399, -1.0
        %v1401 = vadd.f32 %v1400, 1.0
        %v1402 = vmul.f32 %v1359, %v1401
        %v1403 = vld [vmem:[%s608] sm:$0xff]
        %v1404 = vld [vmem:[%s608 + $0x8] sm:$0xff]
        %v1405 = vld [vmem:[%s608 + $0x10] sm:$0xff]
        %v1406 = vld [vmem:[%s608 + $0x18] sm:$0xff]
        %v1407 = vld [vmem:[%s608 + $0x20] sm:$0xff]
        %v1408 = vld [vmem:[%s608 + $0x28] sm:$0xff]
        %v1409 = vld [vmem:[%s608 + $0x30] sm:$0xff]
        %v1410 = vld [vmem:[%s608 + $0x38] sm:$0xff]
        %v1411 = vld [vmem:[%s608 + $0x40] sm:$0xff]
        %v1412 = vld [vmem:[%s608 + $0x48] sm:$0xff]
        %v1413 = vld [vmem:[%s608 + $0x50] sm:$0xff]
        %v1414 = vld [vmem:[%s608 + $0x58] sm:$0xff]
        %v1415 = vld [vmem:[%s608 + $0x60] sm:$0xff]
        %v1416 = vld [vmem:[%s608 + $0x68] sm:$0xff]
        %v1417 = vld [vmem:[%s608 + $0x70] sm:$0xff]
        %v1418 = vld [vmem:[%s608 + $0x78] sm:$0xff]
        %1419 = vmatpush.msra.mxu0 %v1418
        %1420 = vmatpush.msra.mxu0 %v1417
        %1421 = vmatpush.msra.mxu0 %v1416
        %1422 = vmatpush.msra.mxu0 %v1415
        %1423 = vmatpush.msra.mxu0 %v1414
        %1424 = vmatpush.msra.mxu0 %v1413
        %1425 = vmatpush.msra.mxu0 %v1412
        %1426 = vmatpush.msra.mxu0 %v1411
        %1427 = vmatpush.msra.mxu0 %v1410
        %1428 = vmatpush.msra.mxu0 %v1409
        %1429 = vmatpush.msra.mxu0 %v1408
        %1430 = vmatpush.msra.mxu0 %v1407
        %1431 = vmatpush.msra.mxu0 %v1406
        %1432 = vmatpush.msra.mxu0 %v1405
        %1433 = vmatpush.msra.mxu0 %v1404
        %1434 = vmatpush.msra.mxu0 %v1403
        %1435 = vmatmul.f32.gmra.mxu0 %v1402
        %v1436 = vpop.f32.mrf.mxu0
        %v1437 = vadd.f32 0.0, %v1436
        %1438 = vdwg.mxu0
        %v1439 = vadd.f32 %v1295, %v1437
        %v1440 = vld [vmem:[%s611] sm:$0x1]
        %v1442 = vperm.slane %v1440, 0
        %v1444 = vadd.f32 %v1439, %v1442
        %p1445 = scmp.lt.s32.totalorder %s32, 1
        // Predicated region
        $region77: #{tpu_custom_call.1} parent=71 // pred_check
          %p1446 = pneg %p1445
        $region78: #{tpu_custom_call.1} parent=71 // pred_check_branch
          %1448 = sbr.rel (%p1446) target = $region80
        $region79: #{tpu_custom_call.1} parent=71 // pred_region
          %1449 = vst.msk [vmem:[%s569] sm:$0xff] %vm622, %v1444
        $region80: #{tpu_custom_call.1} parent=71 // pred_fallthru
          _
        %p1450 = scmp.eq.s32.totalorder %s32, 1
        // Predicated region
        $region81: #{tpu_custom_call.1} parent=71 // pred_check
          %p1451 = pneg %p1450
        $region82: #{tpu_custom_call.1} parent=71 // pred_check_branch
          %1453 = sbr.rel (%p1451) target = $region84
        $region83: #{tpu_custom_call.1} parent=71 // pred_region
          %v1454 = vld [vmem:[%s11] sm:$0x1]
          %v1455 = vld [vmem:[%s12] sm:$0x1]
          %v1456 = vsel %vm622, %v1444, 0.0
          %1457 = vadd.xlane.f32.xlu0 %v1456
          %v1458 = vpop.xlane.xlu0 %1457
          %v1459 = vmul.f32 %v1458, %v632
          %v1460 = vsub.f32 %v1444, %v1459
          %v1461 = vmul.f32 %v1460, %v1460
          %v1462 = vsel %vm622, %v1461, 0.0
          %1463 = vadd.xlane.f32.xlu0 %v1462
          %v1464 = vpop.xlane.xlu0 %1463
          %v1465 = vmul.f32 %v1464, %v632
          %v1466 = vadd.f32 %v1465, 1e-05
          %v1467 = vrsqrt.pop %v1466
          %v1468 = vmul.f32 %v1467, %v1466
          %v1469 = vmul.f32 %v1468, %v1467
          %v1470 = vmul.f32 0.5, %v1469
          %v1471 = vsub.f32 1.5, %v1470
          %v1472 = vmul.f32 %v1467, %v1471
          %vm1473 = vweird.f32 %v1466
          %vm1474 = vweird.f32 %v1467
          %vm1475 = vmor %vm1473, %vm1474
          %v1476 = vsel %vm1475, %v1467, %v1472
          %v1477 = vmul.f32 %v1460, %v1476
          %v1479 = vperm.slane %v1454, 0
          %v1481 = vmul.f32 %v1477, %v1479
          %v1483 = vperm.slane %v1455, 0
          %v1485 = vadd.f32 %v1481, %v1483
          %1486 = vst.msk [vmem:[%s569] sm:$0xff] %vm622, %v1485
        $region84: #{tpu_custom_call.1} parent=71 // pred_fallthru
          _
        %s1487 = sand.u32 %s375, 1
        %s1488 = scalar_lea.sflag [#allocation3], %s1487
        %s1489 = sand.u32 %s375, 1
        %s1490 = smul.addr %s1489, 8
        %s1491 = scalar_lea.vmem [#allocation2], %s1490
        // Predicated region
        $region85: #{tpu_custom_call.1} parent=71 // pred_check
          %p1492 = pneg %p385
        $region86: #{tpu_custom_call.1} parent=71 // pred_check_branch
          %1494 = sbr.rel (%p1492) target = $region88
        $region87: #{tpu_custom_call.1} parent=71 // pred_region
          %1496 = vsyncadd %s1488, 0
          %s1497 = smul.addr %s31, 8
          %s1498 = scalar_lea.hbm %s13, %s1497
          %s1500 = sshll.u32 %s1491, 4
          %s1501 = int_to_ptr.vmem [resolvable:$true] %s1500
          %s1502 = sshll.u32 %s1498, 4
          %s1503 = int_to_ptr.hbm [resolvable:$true] %s1502
          %1505 = dma.vmem_to_hbm [thread:$0]  %s1501, 128, %s1503, %s1488
        $region88: #{tpu_custom_call.1} parent=71 // pred_fallthru
          _
      $region72: #{tpu_custom_call.1} parent=5 // pred_fallthru
        _
      %p1506 = scmp.le.s32.totalorder 2, %s22
      // Predicated region
      $region89: #{tpu_custom_call.1} parent=5 // pred_check
        %p1507 = pneg %p1506
      $region90: #{tpu_custom_call.1} parent=5 // pred_check_branch
        %1509 = sbr.rel (%p1507) target = $region92
      $region91: #{tpu_custom_call.1} parent=5 // pred_region
        %s1510 = ssub.s32 %s22, 2
        // Predicated region
        $region93: #{tpu_custom_call.1} parent=91 // pred_check
          %p1511 = pneg %p391
        $region94: #{tpu_custom_call.1} parent=91 // pred_check_branch
          %1513 = sbr.rel (%p1511) target = $region96
        $region95: #{tpu_custom_call.1} parent=91 // pred_region
          %s1514 = sand.u32 %s376, 1
          %s1515 = scalar_lea.sflag [#allocation3], %s1514
          %s1516 = sand.u32 %s376, 1
          %s1517 = smul.addr %s1516, 8
          %s1518 = scalar_lea.vmem [#allocation2], %s1517
          %1520 = dma.done %s1515, 128
        $region96: #{tpu_custom_call.1} parent=91 // pred_fallthru
          _
      $region92: #{tpu_custom_call.1} parent=5 // pred_fallthru
        _
    $region6: #{tpu_custom_call.1} parent=1 // loop_footer
      %s26 = sadd.s32 1, %s22
    $region7: #{tpu_custom_call.1} parent=1 // loop_footer_branch
      %21 = sbr.rel target = $region3
    $region8: #{tpu_custom_call.1} parent=1 // loop_exit
      _
    %1521 = vsyncpa [#allocation3], 1
    %s1522 = scalar_lea.sflag [#allocation3], 1
    %1523 = vsyncpa %s1522, 1

</llo_original>
